<compile_context>
chip_gen: v7x
topology: tpu7x:2x2x1
jax: 0.10.0
libtpu: 0.0.40
codegen_flags: <defaults>
</compile_context>

<pallas_src>
import jax
import jax.numpy as jnp
from jax.experimental import pallas as pl
from jax.experimental.pallas import tpu as pltpu


def _prob_gaussian_kernel(x_ref, w_mu_ref, b_mu_ref, w_ls_ref, b_ls_ref, eps_ref,
                          mean_ref, var_ref, z_ref):
    """One batch tile.

    x_ref:    (TILE_N, D_IN)        activations (f32 or bf16)
    w_*_ref:  (D_IN, D_OUT)         weights, resident across the grid
    b_*_ref:  (1, D_OUT)            biases, resident, f32
    eps_ref:  (TILE_N, D_OUT)       reparameterization noise, f32
    mean/var/z_ref: (TILE_N, D_OUT) f32 outputs, written directly
    """
    x = x_ref[...]
    # Two MXU dots sharing the same x tile, f32 accumulate.
    mean = jnp.dot(x, w_mu_ref[...], preferred_element_type=jnp.float32) + b_mu_ref[...]
    log_std = jnp.dot(x, w_ls_ref[...], preferred_element_type=jnp.float32) + b_ls_ref[...]

    std = jnp.exp(log_std)          # single EUP pass
    variance = std * std            # == exp(2*log_std), VPU multiply
    z = mean + std * eps_ref[...]   # reparameterized sample

    # Direct stores (no concat temp).  NOTE: the ragged last batch block runs
    # exp() on unspecified padding rows; those writes are masked/dropped by
    # Pallas, so any transient Inf/NaN there is harmless.
    mean_ref[...] = mean.astype(mean_ref.dtype)
    var_ref[...] = variance.astype(var_ref.dtype)
    z_ref[...] = z.astype(z_ref.dtype)


def probability_layer_gaussian(x, w_mu, b_mu, w_ls, b_ls, eps, *,
                               tile_n=512, compute_dtype=None):
    """x: (N, D_in); w_*: (D_in, D_out); b_*: (D_out,); eps: (N, D_out).

    Returns (mean, variance, z), each (N, D_out) float32.
    compute_dtype: optionally cast x and the weights (e.g. jnp.bfloat16) to
    halve input DMA bytes; accumulation and outputs stay float32.
    """
    n, d_in = x.shape
    d_out = w_mu.shape[1]

    if compute_dtype is not None:
        x = x.astype(compute_dtype)
        w_mu = w_mu.astype(compute_dtype)
        w_ls = w_ls.astype(compute_dtype)
    b_mu2 = b_mu.astype(jnp.float32).reshape(1, d_out)
    b_ls2 = b_ls.astype(jnp.float32).reshape(1, d_out)
    eps = eps.astype(jnp.float32)

    # ---- Row-tile selection --------------------------------------------------
    tile_n = max(8, min(tile_n, n))
    tile_n = max(8, (tile_n // 8) * 8)            # sublane (8) aligned
    if n > 8:
        # v7x has 2 TensorCores: keep >= 2 grid steps so the "parallel" batch
        # axis can be split across both cores.
        half = ((pl.cdiv(n, 2) + 7) // 8) * 8
        tile_n = min(tile_n, half)

    in_itemsize = jnp.dtype(x.dtype).itemsize

    def _vmem_demand(t):
        # BlockSpec pipelining double-buffers every operand.
        return (2 * t * d_in * in_itemsize               # x tiles
                + 2 * t * d_out * 4                      # eps tiles
                + 2 * 3 * t * d_out * 4                  # mean / var / z tiles
                + 2 * 2 * d_in * d_out * in_itemsize     # resident weights
                + 2 * 2 * d_out * 4)                     # resident biases

    # Stay under a v7x-safe budget (64 MiB physical VMEM).
    budget = 48 * 1024 * 1024
    while tile_n > 8 and _vmem_demand(tile_n) > budget:
        tile_n = max(8, ((tile_n // 2) // 8) * 8)
    # TODO(synk): if the resident weights alone approach the budget (very large
    #             d_in*d_out), add a K grid axis with a VMEM accumulator instead.

    vmem_limit = int(min(64 * 1024 * 1024,
                         max(16 * 1024 * 1024, _vmem_demand(tile_n) + (2 << 20))))

    # No wrapper-side padding: Pallas masks the ragged last block.
    grid = (pl.cdiv(n, tile_n),)

    cost = pl.CostEstimate(
        flops=4 * n * d_in * d_out,        # two GEMMs
        transcendentals=n * d_out,         # one exp per output element
        bytes_accessed=(in_itemsize * (n * d_in + 2 * d_in * d_out)
                        + 4 * (2 * d_out + n * d_out + 3 * n * d_out)),
    )

    mean, variance, z = pl.pallas_call(
        _prob_gaussian_kernel,
        out_shape=(jax.ShapeDtypeStruct((n, d_out), jnp.float32),
                   jax.ShapeDtypeStruct((n, d_out), jnp.float32),
                   jax.ShapeDtypeStruct((n, d_out), jnp.float32)),
        grid=grid,
        in_specs=[
            pl.BlockSpec((tile_n, d_in), lambda i: (i, 0)),    # x tile
            pl.BlockSpec((d_in, d_out), lambda i: (0, 0)),     # W_mu (resident)
            pl.BlockSpec((1, d_out), lambda i: (0, 0)),        # b_mu (resident)
            pl.BlockSpec((d_in, d_out), lambda i: (0, 0)),     # W_ls (resident)
            pl.BlockSpec((1, d_out), lambda i: (0, 0)),        # b_ls (resident)
            pl.BlockSpec((tile_n, d_out), lambda i: (i, 0)),   # eps tile
        ],
        out_specs=(
            pl.BlockSpec((tile_n, d_out), lambda i: (i, 0)),   # mean
            pl.BlockSpec((tile_n, d_out), lambda i: (i, 0)),   # variance
            pl.BlockSpec((tile_n, d_out), lambda i: (i, 0)),   # z
        ),
        compiler_params=pltpu.CompilerParams(
            dimension_semantics=("parallel",),
            vmem_limit_bytes=vmem_limit,
        ),
        cost_estimate=cost,
    )(x, w_mu, b_mu2, w_ls, b_ls2, eps)

    return mean, variance, z


if __name__ == "__main__":
    # N not a multiple of the tile to exercise the ragged (masked) last block,
    # tile_n=128 to exercise a multi-step pipelined grid (4 steps).
    N, D_IN, D_OUT = 500, 32, 16
    TILE_N = 128

    key = jax.random.PRNGKey(0)
    kx, kwm, kbm, kwl, kbl, keps = jax.random.split(key, 6)

    x = jax.random.normal(kx, (N, D_IN), dtype=jnp.float32)

    # nn.Linear(input_dims, output_dims): weight (out, in), bias (out,);
    # stored here pre-transposed to (in, out).
    bound = 1.0 / jnp.sqrt(jnp.float32(D_IN))
    w_mu = jax.random.uniform(kwm, (D_IN, D_OUT), jnp.float32, -bound, bound)
    b_mu = jax.random.uniform(kbm, (D_OUT,), jnp.float32, -bound, bound)
    w_ls = jax.random.uniform(kwl, (D_IN, D_OUT), jnp.float32, -bound, bound)
    b_ls = jax.random.uniform(kbl, (D_OUT,), jnp.float32, -bound, bound)

    # Standard normal noise for the reparameterization trick (rsample).
    eps = jax.random.normal(keps, (N, D_OUT), dtype=jnp.float32)

    # f32 path: matches the PyTorch reference semantics.
    mean, variance, z = probability_layer_gaussian(
        x, w_mu, b_mu, w_ls, b_ls, eps, tile_n=TILE_N)
    jax.block_until_ready((mean, variance, z))

    mean_ref = x @ w_mu + b_mu
    log_std_ref = x @ w_ls + b_ls
    var_ref = jnp.exp(2.0 * log_std_ref)
    z_ref = mean_ref + jnp.exp(log_std_ref) * eps

    assert mean.shape == (N, D_OUT) and variance.shape == (N, D_OUT) and z.shape == (N, D_OUT)
    assert jnp.allclose(mean, mean_ref, atol=1e-5)
    assert jnp.allclose(variance, var_ref, atol=1e-5)
    assert jnp.allclose(z, z_ref, atol=1e-5)

    # bf16-input path (halved input DMA bytes; f32 accumulate / f32 outputs).
    mean_bf, var_bf, z_bf = probability_layer_gaussian(
        x, w_mu, b_mu, w_ls, b_ls, eps, tile_n=TILE_N, compute_dtype=jnp.bfloat16)
    jax.block_until_ready((mean_bf, var_bf, z_bf))
    assert bool(jnp.all(jnp.isfinite(mean_bf)))
    assert bool(jnp.all(jnp.isfinite(var_bf)))
    assert bool(jnp.all(jnp.isfinite(z_bf)))
    assert jnp.allclose(mean_bf, mean_ref, atol=0.1, rtol=0.1)

    print("KERNEL_OK")
</pallas_src>

<mosaic_0001>
module attributes {stable_mosaic.version = 11 : i64} {
  func.func @_prob_gaussian_kernel(%arg0: i32, %arg1: memref<128x32xf32, #tpu.memory_space<vmem>>, %arg2: memref<32x16xf32, #tpu.memory_space<vmem>>, %arg3: memref<1x16xf32, #tpu.memory_space<vmem>>, %arg4: memref<32x16xf32, #tpu.memory_space<vmem>>, %arg5: memref<1x16xf32, #tpu.memory_space<vmem>>, %arg6: memref<128x16xf32, #tpu.memory_space<vmem>>, %arg7: memref<128x16xf32, #tpu.memory_space<vmem>>, %arg8: memref<128x16xf32, #tpu.memory_space<vmem>>, %arg9: memref<128x16xf32, #tpu.memory_space<vmem>>) attributes {dimension_semantics = [#tpu.dimension_semantics<parallel>], iteration_bounds = array<i64: 4>, scalar_prefetch = 0 : i64, scratch_operands = 0 : i64, tpu.core_type = #tpu.core_type<tc>, window_params = [{transform_indices = @transform_0, window_bounds = array<i64: 128, 32>}, {pipeline_mode = #tpu.pipeline_mode<synchronous>, transform_indices = @transform_1, window_bounds = array<i64: 32, 16>}, {pipeline_mode = #tpu.pipeline_mode<synchronous>, transform_indices = @transform_2, window_bounds = array<i64: 1, 16>}, {pipeline_mode = #tpu.pipeline_mode<synchronous>, transform_indices = @transform_3, window_bounds = array<i64: 32, 16>}, {pipeline_mode = #tpu.pipeline_mode<synchronous>, transform_indices = @transform_4, window_bounds = array<i64: 1, 16>}, {transform_indices = @transform_5, window_bounds = array<i64: 128, 16>}, {transform_indices = @transform_6, window_bounds = array<i64: 128, 16>}, {transform_indices = @transform_7, window_bounds = array<i64: 128, 16>}, {transform_indices = @transform_8, window_bounds = array<i64: 128, 16>}]} {
    %c0 = arith.constant 0 : index
    %c0_0 = arith.constant 0 : index
    %0 = vector.load %arg1[%c0, %c0_0] : memref<128x32xf32, #tpu.memory_space<vmem>>, vector<128x32xf32>
    %c0_1 = arith.constant 0 : index
    %c0_2 = arith.constant 0 : index
    %1 = vector.load %arg2[%c0_1, %c0_2] : memref<32x16xf32, #tpu.memory_space<vmem>>, vector<32x16xf32>
    %cst = arith.constant dense<0.000000e+00> : vector<128x16xf32>
    %2 = tpu.matmul %0, %1, %cst {dimension_numbers = #tpu.dot_dimension_numbers<[1], [0], [0], [1], [0, 0, 1, 1], [], []>} : vector<128x32xf32>, vector<32x16xf32>, vector<128x16xf32> -> vector<128x16xf32>
    %c0_3 = arith.constant 0 : index
    %c0_4 = arith.constant 0 : index
    %3 = vector.load %arg3[%c0_3, %c0_4] : memref<1x16xf32, #tpu.memory_space<vmem>>, vector<1x16xf32>
    %4 = vector.broadcast %3 : vector<1x16xf32> to vector<128x16xf32>
    %5 = arith.addf %2, %4 : vector<128x16xf32>
    %c0_5 = arith.constant 0 : index
    %c0_6 = arith.constant 0 : index
    %6 = vector.load %arg4[%c0_5, %c0_6] : memref<32x16xf32, #tpu.memory_space<vmem>>, vector<32x16xf32>
    %cst_7 = arith.constant dense<0.000000e+00> : vector<128x16xf32>
    %7 = tpu.matmul %0, %6, %cst_7 {dimension_numbers = #tpu.dot_dimension_numbers<[1], [0], [0], [1], [0, 0, 1, 1], [], []>} : vector<128x32xf32>, vector<32x16xf32>, vector<128x16xf32> -> vector<128x16xf32>
    %c0_8 = arith.constant 0 : index
    %c0_9 = arith.constant 0 : index
    %8 = vector.load %arg5[%c0_8, %c0_9] : memref<1x16xf32, #tpu.memory_space<vmem>>, vector<1x16xf32>
    %9 = vector.broadcast %8 : vector<1x16xf32> to vector<128x16xf32>
    %10 = arith.addf %7, %9 : vector<128x16xf32>
    %11 = math.exp %10 : vector<128x16xf32>
    %12 = arith.mulf %11, %11 : vector<128x16xf32>
    %c0_10 = arith.constant 0 : index
    %c0_11 = arith.constant 0 : index
    %13 = vector.load %arg6[%c0_10, %c0_11] : memref<128x16xf32, #tpu.memory_space<vmem>>, vector<128x16xf32>
    %14 = arith.mulf %11, %13 : vector<128x16xf32>
    %15 = arith.addf %5, %14 : vector<128x16xf32>
    %c0_12 = arith.constant 0 : index
    %c0_13 = arith.constant 0 : index
    %16 = vector.load %arg7[%c0_12, %c0_13] : memref<128x16xf32, #tpu.memory_space<vmem>>, vector<128x16xf32>
    tpu.vector_store %arg7[%c0_12, %c0_13], %5 {strides = array<i32>} : memref<128x16xf32, #tpu.memory_space<vmem>>, vector<128x16xf32>,
    %c0_14 = arith.constant 0 : index
    %c0_15 = arith.constant 0 : index
    %17 = vector.load %arg8[%c0_14, %c0_15] : memref<128x16xf32, #tpu.memory_space<vmem>>, vector<128x16xf32>
    tpu.vector_store %arg8[%c0_14, %c0_15], %12 {strides = array<i32>} : memref<128x16xf32, #tpu.memory_space<vmem>>, vector<128x16xf32>,
    %c0_16 = arith.constant 0 : index
    %c0_17 = arith.constant 0 : index
    %18 = vector.load %arg9[%c0_16, %c0_17] : memref<128x16xf32, #tpu.memory_space<vmem>>, vector<128x16xf32>
    tpu.vector_store %arg9[%c0_16, %c0_17], %15 {strides = array<i32>} : memref<128x16xf32, #tpu.memory_space<vmem>>, vector<128x16xf32>,
    return
  }
  func.func @transform_0(%arg0: i32) -> (i32, i32) {
    %c0_i32 = arith.constant 0 : i32
    %c0_i32_0 = arith.constant 0 : i32
    return %arg0, %c0_i32 : i32, i32
  }
  func.func @transform_1(%arg0: i32) -> (i32, i32) {
    %c0_i32 = arith.constant 0 : i32
    %c0_i32_0 = arith.constant 0 : i32
    %c0_i32_1 = arith.constant 0 : i32
    return %c0_i32, %c0_i32_0 : i32, i32
  }
  func.func @transform_2(%arg0: i32) -> (i32, i32) {
    %c0_i32 = arith.constant 0 : i32
    %c0_i32_0 = arith.constant 0 : i32
    %c0_i32_1 = arith.constant 0 : i32
    return %c0_i32, %c0_i32_0 : i32, i32
  }
  func.func @transform_3(%arg0: i32) -> (i32, i32) {
    %c0_i32 = arith.constant 0 : i32
    %c0_i32_0 = arith.constant 0 : i32
    %c0_i32_1 = arith.constant 0 : i32
    return %c0_i32, %c0_i32_0 : i32, i32
  }
  func.func @transform_4(%arg0: i32) -> (i32, i32) {
    %c0_i32 = arith.constant 0 : i32
    %c0_i32_0 = arith.constant 0 : i32
    %c0_i32_1 = arith.constant 0 : i32
    return %c0_i32, %c0_i32_0 : i32, i32
  }
  func.func @transform_5(%arg0: i32) -> (i32, i32) {
    %c0_i32 = arith.constant 0 : i32
    %c0_i32_0 = arith.constant 0 : i32
    return %arg0, %c0_i32 : i32, i32
  }
  func.func @transform_6(%arg0: i32) -> (i32, i32) {
    %c0_i32 = arith.constant 0 : i32
    %c0_i32_0 = arith.constant 0 : i32
    return %arg0, %c0_i32 : i32, i32
  }
  func.func @transform_7(%arg0: i32) -> (i32, i32) {
    %c0_i32 = arith.constant 0 : i32
    %c0_i32_0 = arith.constant 0 : i32
    return %arg0, %c0_i32 : i32, i32
  }
  func.func @transform_8(%arg0: i32) -> (i32, i32) {
    %c0_i32 = arith.constant 0 : i32
    %c0_i32_0 = arith.constant 0 : i32
    return %arg0, %c0_i32 : i32, i32
  }
}

</mosaic_0001>

<llo_original>
// kernel: tpu_custom_call.1
$region0: #{tpu_custom_call.1}
  #allocation0 [shape = 'u32[]', space=smem, size = 0x4, offset = 0x4, fixed_abs, tag = 'smem constant byte address 0x4 - core index']
  #allocation1 [shape = 'u32[144,128]{1,0:T(1,128)}', space=vmem, size = 0x12000, scoped, tag = 'internal scratch']
  %s0 = inlined_call_operand.vmem [shape: f32[500,32], index: 0, kind: input, shape index: {}]
  %s1 = inlined_call_operand.vmem [shape: f32[32,16], index: 1, kind: input, shape index: {}]
  %s2 = inlined_call_operand.vmem [shape: f32[1,16], index: 2, kind: input, shape index: {}]
  %s3 = inlined_call_operand.vmem [shape: f32[32,16], index: 3, kind: input, shape index: {}]
  %s4 = inlined_call_operand.vmem [shape: f32[1,16], index: 4, kind: input, shape index: {}]
  %s5 = inlined_call_operand.vmem [shape: f32[500,16], index: 5, kind: input, shape index: {}]
  %s6 = inlined_call_operand.vmem [shape: f32[500,16], index: 6, kind: output, shape index: {0}]
  %s7 = inlined_call_operand.vmem [shape: f32[500,16], index: 7, kind: output, shape index: {1}]
  %s8 = inlined_call_operand.vmem [shape: f32[500,16], index: 8, kind: output, shape index: {2}]
  %9 = xla_tuple %s6, %s7, %s8
  %s10 = sld [smem:[#allocation0]]
  $region217: #{tpu_custom_call.1} parent=0
    _
  %s12 = ssub.s32 1, %s10
  %s13 = scalar_select 0, %s12, %s10
  $region1: #{tpu_custom_call.1} parent=0
    #allocation2 [shape = 'u8[131072]{0}', space=vmem, size = 0x20000, scoped, tag = 'output window, operand 0']
    #allocation3 [shape = 'u8[131072]{0}', space=vmem, size = 0x20000, scoped, tag = 'output window, operand 1']
    #allocation4 [shape = 'u8[131072]{0}', space=vmem, size = 0x20000, scoped, tag = 'output window, operand 2']
    loop: start=0, step=1, limit=6
    $region2: #{tpu_custom_call.1} parent=1 // loop_pre_header
      _
    $region3: #{tpu_custom_call.1} parent=1 // loop_header
      %s15 = sphi 0, %s19
      %p16 = scmp.ge.s32.totalorder %s15, 6
      %s25 = sphi 0, %s27
      %s28 = sphi 0, %s25
      %s29 = sphi 0, %s28
      %s45 = sphi 0, %s29
      %s49 = sphi 0, %s49
      %s51 = sphi 0, %s49
      %s52 = sphi 0, %s51
      %s66 = sphi 0, %s52
      %s70 = sphi 0, %s70
      %s72 = sphi 0, %s70
      %s73 = sphi 0, %s72
      %s87 = sphi 0, %s73
      %s91 = sphi 0, %s91
      %s93 = sphi 0, %s91
      %s94 = sphi 0, %s93
      %s108 = sphi 0, %s94
      %s112 = sphi 0, %s112
      %s114 = sphi 0, %s112
      %s115 = sphi 0, %s114
      %s129 = sphi 0, %s115
      %s135 = sphi 0, %s137
      %s138 = sphi 0, %s135
      %s139 = sphi 0, %s138
      %s155 = sphi 0, %s139
      %s161 = sphi 0, %s163
      %s164 = sphi 0, %s161
      %s165 = sphi 0, %s164
      %s181 = sphi 0, %s165
      %s187 = sphi 0, %s189
      %s190 = sphi 0, %s187
      %s191 = sphi 0, %s190
      %s207 = sphi 0, %s191
      %s213 = sphi 0, %s215
      %s216 = sphi 0, %s213
      %s217 = sphi 0, %s216
      %s233 = sphi 0, %s217
    $region4: #{tpu_custom_call.1} parent=1 // loop_header_branch
      %18 = sbr.rel (%p16) target = $region8
    $region5: #{tpu_custom_call.1} parent=1 // loop_body
      %s20 = ssub.s32 %s15, 1
      %s21 = ssub.s32 %s15, 2
      %s22 = sadd.s32 %s15, 1
      %s23 = ssub.s32 %s15, %s22
      %p24 = scmp.eq.s32.totalorder %s23, 0
      %s26 = sadd.s32 %s25, 1
      %s27 = scalar_select %p24, %s25, %s26
      %p30 = pneg %p24
      %p31 = scmp.eq.s32.totalorder %s15, 3
      %p32 = por %p30, %p31
      %p33 = scmp.ne.s32.totalorder %s25, %s28
      %p34 = scmp.eq.s32.totalorder %s15, 0
      %p35 = por %p33, %p34
      %p36 = scmp.ne.s32.totalorder %s25, %s28
      %p37 = scmp.eq.s32.totalorder %s20, 3
      %p38 = por %p36, %p37
      %p39 = scmp.ne.s32.totalorder %s28, %s29
      %p40 = scmp.eq.s32.totalorder %s20, 0
      %p41 = por %p39, %p40
      %p42 = scmp.ne.s32.totalorder %s28, %s29
      %p43 = scmp.eq.s32.totalorder %s21, 3
      %p44 = por %p42, %p43
      %p46 = scmp.ne.s32.totalorder %s29, %s45
      %p47 = scmp.eq.s32.totalorder %s21, 0
      %p48 = por %p46, %p47
      %s50 = sadd.s32 %s49, 1
      %p53 = scmp.eq.s32.totalorder %s15, 3
      %p54 = scmp.ne.s32.totalorder %s49, %s51
      %p55 = scmp.eq.s32.totalorder %s15, 0
      %p56 = por %p54, %p55
      %p57 = scmp.ne.s32.totalorder %s49, %s51
      %p58 = scmp.eq.s32.totalorder %s20, 3
      %p59 = por %p57, %p58
      %p60 = scmp.ne.s32.totalorder %s51, %s52
      %p61 = scmp.eq.s32.totalorder %s20, 0
      %p62 = por %p60, %p61
      %p63 = scmp.ne.s32.totalorder %s51, %s52
      %p64 = scmp.eq.s32.totalorder %s21, 3
      %p65 = por %p63, %p64
      %p67 = scmp.ne.s32.totalorder %s52, %s66
      %p68 = scmp.eq.s32.totalorder %s21, 0
      %p69 = por %p67, %p68
      %s71 = sadd.s32 %s70, 1
      %p74 = scmp.eq.s32.totalorder %s15, 3
      %p75 = scmp.ne.s32.totalorder %s70, %s72
      %p76 = scmp.eq.s32.totalorder %s15, 0
      %p77 = por %p75, %p76
      %p78 = scmp.ne.s32.totalorder %s70, %s72
      %p79 = scmp.eq.s32.totalorder %s20, 3
      %p80 = por %p78, %p79
      %p81 = scmp.ne.s32.totalorder %s72, %s73
      %p82 = scmp.eq.s32.totalorder %s20, 0
      %p83 = por %p81, %p82
      %p84 = scmp.ne.s32.totalorder %s72, %s73
      %p85 = scmp.eq.s32.totalorder %s21, 3
      %p86 = por %p84, %p85
      %p88 = scmp.ne.s32.totalorder %s73, %s87
      %p89 = scmp.eq.s32.totalorder %s21, 0
      %p90 = por %p88, %p89
      %s92 = sadd.s32 %s91, 1
      %p95 = scmp.eq.s32.totalorder %s15, 3
      %p96 = scmp.ne.s32.totalorder %s91, %s93
      %p97 = scmp.eq.s32.totalorder %s15, 0
      %p98 = por %p96, %p97
      %p99 = scmp.ne.s32.totalorder %s91, %s93
      %p100 = scmp.eq.s32.totalorder %s20, 3
      %p101 = por %p99, %p100
      %p102 = scmp.ne.s32.totalorder %s93, %s94
      %p103 = scmp.eq.s32.totalorder %s20, 0
      %p104 = por %p102, %p103
      %p105 = scmp.ne.s32.totalorder %s93, %s94
      %p106 = scmp.eq.s32.totalorder %s21, 3
      %p107 = por %p105, %p106
      %p109 = scmp.ne.s32.totalorder %s94, %s108
      %p110 = scmp.eq.s32.totalorder %s21, 0
      %p111 = por %p109, %p110
      %s113 = sadd.s32 %s112, 1
      %p116 = scmp.eq.s32.totalorder %s15, 3
      %p117 = scmp.ne.s32.totalorder %s112, %s114
      %p118 = scmp.eq.s32.totalorder %s15, 0
      %p119 = por %p117, %p118
      %p120 = scmp.ne.s32.totalorder %s112, %s114
      %p121 = scmp.eq.s32.totalorder %s20, 3
      %p122 = por %p120, %p121
      %p123 = scmp.ne.s32.totalorder %s114, %s115
      %p124 = scmp.eq.s32.totalorder %s20, 0
      %p125 = por %p123, %p124
      %p126 = scmp.ne.s32.totalorder %s114, %s115
      %p127 = scmp.eq.s32.totalorder %s21, 3
      %p128 = por %p126, %p127
      %p130 = scmp.ne.s32.totalorder %s115, %s129
      %p131 = scmp.eq.s32.totalorder %s21, 0
      %p132 = por %p130, %p131
      %s133 = ssub.s32 %s15, %s22
      %p134 = scmp.eq.s32.totalorder %s133, 0
      %s136 = sadd.s32 %s135, 1
      %s137 = scalar_select %p134, %s135, %s136
      %p140 = pneg %p134
      %p141 = scmp.eq.s32.totalorder %s15, 3
      %p142 = por %p140, %p141
      %p143 = scmp.ne.s32.totalorder %s135, %s138
      %p144 = scmp.eq.s32.totalorder %s15, 0
      %p145 = por %p143, %p144
      %p146 = scmp.ne.s32.totalorder %s135, %s138
      %p147 = scmp.eq.s32.totalorder %s20, 3
      %p148 = por %p146, %p147
      %p149 = scmp.ne.s32.totalorder %s138, %s139
      %p150 = scmp.eq.s32.totalorder %s20, 0
      %p151 = por %p149, %p150
      %p152 = scmp.ne.s32.totalorder %s138, %s139
      %p153 = scmp.eq.s32.totalorder %s21, 3
      %p154 = por %p152, %p153
      %p156 = scmp.ne.s32.totalorder %s139, %s155
      %p157 = scmp.eq.s32.totalorder %s21, 0
      %p158 = por %p156, %p157
      %s159 = ssub.s32 %s15, %s22
      %p160 = scmp.eq.s32.totalorder %s159, 0
      %s162 = sadd.s32 %s161, 1
      %s163 = scalar_select %p160, %s161, %s162
      %p166 = pneg %p160
      %p167 = scmp.eq.s32.totalorder %s15, 3
      %p168 = por %p166, %p167
      %p169 = scmp.ne.s32.totalorder %s161, %s164
      %p170 = scmp.eq.s32.totalorder %s15, 0
      %p171 = por %p169, %p170
      %p172 = scmp.ne.s32.totalorder %s161, %s164
      %p173 = scmp.eq.s32.totalorder %s20, 3
      %p174 = por %p172, %p173
      %p175 = scmp.ne.s32.totalorder %s164, %s165
      %p176 = scmp.eq.s32.totalorder %s20, 0
      %p177 = por %p175, %p176
      %p178 = scmp.ne.s32.totalorder %s164, %s165
      %p179 = scmp.eq.s32.totalorder %s21, 3
      %p180 = por %p178, %p179
      %p182 = scmp.ne.s32.totalorder %s165, %s181
      %p183 = scmp.eq.s32.totalorder %s21, 0
      %p184 = por %p182, %p183
      %s185 = ssub.s32 %s15, %s22
      %p186 = scmp.eq.s32.totalorder %s185, 0
      %s188 = sadd.s32 %s187, 1
      %s189 = scalar_select %p186, %s187, %s188
      %p192 = pneg %p186
      %p193 = scmp.eq.s32.totalorder %s15, 3
      %p194 = por %p192, %p193
      %p195 = scmp.ne.s32.totalorder %s187, %s190
      %p196 = scmp.eq.s32.totalorder %s15, 0
      %p197 = por %p195, %p196
      %p198 = scmp.ne.s32.totalorder %s187, %s190
      %p199 = scmp.eq.s32.totalorder %s20, 3
      %p200 = por %p198, %p199
      %p201 = scmp.ne.s32.totalorder %s190, %s191
      %p202 = scmp.eq.s32.totalorder %s20, 0
      %p203 = por %p201, %p202
      %p204 = scmp.ne.s32.totalorder %s190, %s191
      %p205 = scmp.eq.s32.totalorder %s21, 3
      %p206 = por %p204, %p205
      %p208 = scmp.ne.s32.totalorder %s191, %s207
      %p209 = scmp.eq.s32.totalorder %s21, 0
      %p210 = por %p208, %p209
      %s211 = ssub.s32 %s15, %s22
      %p212 = scmp.eq.s32.totalorder %s211, 0
      %s214 = sadd.s32 %s213, 1
      %s215 = scalar_select %p212, %s213, %s214
      %p218 = pneg %p212
      %p219 = scmp.eq.s32.totalorder %s15, 3
      %p220 = por %p218, %p219
      %p221 = scmp.ne.s32.totalorder %s213, %s216
      %p222 = scmp.eq.s32.totalorder %s15, 0
      %p223 = por %p221, %p222
      %p224 = scmp.ne.s32.totalorder %s213, %s216
      %p225 = scmp.eq.s32.totalorder %s20, 3
      %p226 = por %p224, %p225
      %p227 = scmp.ne.s32.totalorder %s216, %s217
      %p228 = scmp.eq.s32.totalorder %s20, 0
      %p229 = por %p227, %p228
      %p230 = scmp.ne.s32.totalorder %s216, %s217
      %p231 = scmp.eq.s32.totalorder %s21, 3
      %p232 = por %p230, %p231
      %p234 = scmp.ne.s32.totalorder %s217, %s233
      %p235 = scmp.eq.s32.totalorder %s21, 0
      %p236 = por %p234, %p235
      %p237 = scmp.le.s32.totalorder 1, %s15
      %p238 = scmp.lt.s32.totalorder %s15, 5
      %p239 = pnand %p237, %p238
      %p240 = pneg %p239
      // Predicated region
      $region9: #{tpu_custom_call.1} parent=5 // pred_check
        _
      $region10: #{tpu_custom_call.1} parent=5 // pred_check_branch
        %242 = sbr.rel (%p239) target = $region12
      $region11: #{tpu_custom_call.1} parent=5 // pred_region
        %s243 = ssub.s32 %s15, 1
        // Predicated region
        $region13: #{tpu_custom_call.1} parent=11 // pred_check
          %p244 = pneg %p62
        $region14: #{tpu_custom_call.1} parent=11 // pred_check_branch
          %246 = sbr.rel (%p244) target = $region16
        $region15: #{tpu_custom_call.1} parent=11 // pred_region
          _
        $region16: #{tpu_custom_call.1} parent=11 // pred_fallthru
          _
        // Predicated region
        $region17: #{tpu_custom_call.1} parent=11 // pred_check
          %p247 = pneg %p83
        $region18: #{tpu_custom_call.1} parent=11 // pred_check_branch
          %249 = sbr.rel (%p247) target = $region20
        $region19: #{tpu_custom_call.1} parent=11 // pred_region
          _
        $region20: #{tpu_custom_call.1} parent=11 // pred_fallthru
          _
        // Predicated region
        $region21: #{tpu_custom_call.1} parent=11 // pred_check
          %p250 = pneg %p104
        $region22: #{tpu_custom_call.1} parent=11 // pred_check_branch
          %252 = sbr.rel (%p250) target = $region24
        $region23: #{tpu_custom_call.1} parent=11 // pred_region
          _
        $region24: #{tpu_custom_call.1} parent=11 // pred_fallthru
          _
        // Predicated region
        $region25: #{tpu_custom_call.1} parent=11 // pred_check
          %p253 = pneg %p125
        $region26: #{tpu_custom_call.1} parent=11 // pred_check_branch
          %255 = sbr.rel (%p253) target = $region28
        $region27: #{tpu_custom_call.1} parent=11 // pred_region
          _
        $region28: #{tpu_custom_call.1} parent=11 // pred_fallthru
          _
      $region12: #{tpu_custom_call.1} parent=5 // pred_fallthru
        _
      %p256 = scmp.lt.s32.totalorder %s15, 4
      // Predicated region
      $region29: #{tpu_custom_call.1} parent=5 // pred_check
        %p257 = pneg %p256
      $region30: #{tpu_custom_call.1} parent=5 // pred_check_branch
        %259 = sbr.rel (%p257) target = $region32
      $region31: #{tpu_custom_call.1} parent=5 // pred_region
        // Predicated region
        $region33: #{tpu_custom_call.1} parent=31 // pred_check
          %p260 = pneg %p35
        $region34: #{tpu_custom_call.1} parent=31 // pred_check_branch
          %262 = sbr.rel (%p260) target = $region36
        $region35: #{tpu_custom_call.1} parent=31 // pred_region
          %s263 = smul.u32 16, %s15
          %s264 = ssub.s32 63, %s263
          %p265 = scmp.lt.s32.totalorder %s264, 16
          %s266 = scalar_select %p265, %s264, 16
          %s267 = smul.u32 128, %s266
          %p268 = scmp.lt.s32.totalorder %s263, 62
          %s269 = scalar_select %p268, %s263, 62
          %s270 = smul.addr %s269, 8
          %s271 = scalar_lea.vmem %s0, %s270
          %s272 = smul.u32 16, %s15
          %s273 = ssub.s32 63, %s272
          %p274 = scmp.lt.s32.totalorder %s273, 16
          %s275 = scalar_select %p274, %s273, 16
          %s276 = smul.u32 128, %s275
        $region36: #{tpu_custom_call.1} parent=31 // pred_fallthru
          _
        // Predicated region
        $region37: #{tpu_custom_call.1} parent=31 // pred_check
          %p277 = pneg %p145
        $region38: #{tpu_custom_call.1} parent=31 // pred_check_branch
          %279 = sbr.rel (%p277) target = $region40
        $region39: #{tpu_custom_call.1} parent=31 // pred_region
          %s280 = smul.u32 16, %s15
          %s281 = ssub.s32 63, %s280
          %p282 = scmp.lt.s32.totalorder %s281, 16
          %s283 = scalar_select %p282, %s281, 16
          %s284 = smul.u32 128, %s283
          %p285 = scmp.lt.s32.totalorder %s280, 62
          %s286 = scalar_select %p285, %s280, 62
          %s287 = smul.addr %s286, 8
          %s288 = scalar_lea.vmem %s5, %s287
          %s289 = smul.u32 16, %s15
          %s290 = ssub.s32 63, %s289
          %p291 = scmp.lt.s32.totalorder %s290, 16
          %s292 = scalar_select %p291, %s290, 16
          %s293 = smul.u32 128, %s292
        $region40: #{tpu_custom_call.1} parent=31 // pred_fallthru
          _
      $region32: #{tpu_custom_call.1} parent=5 // pred_fallthru
        _
      %p294 = scmp.le.s32.totalorder 1, %s15
      %p295 = scmp.lt.s32.totalorder %s15, 5
      %p296 = pnand %p294, %p295
      %p297 = pneg %p296
      // Predicated region
      $region41: #{tpu_custom_call.1} parent=5 // pred_check
        _
      $region42: #{tpu_custom_call.1} parent=5 // pred_check_branch
        %299 = sbr.rel (%p296) target = $region44
      $region43: #{tpu_custom_call.1} parent=5 // pred_region
        %s300 = ssub.s32 %s15, 1
        %s301 = smul.u32 16, %s20
        %s302 = ssub.s32 63, %s301
        %p303 = scmp.lt.s32.totalorder %s302, 16
        %s304 = scalar_select %p303, %s302, 16
        %s305 = smul.u32 128, %s304
        %p306 = scmp.lt.s32.totalorder %s301, 62
        %s307 = scalar_select %p306, %s301, 62
        %s308 = smul.addr %s307, 8
        %s309 = scalar_lea.vmem %s0, %s308
        %p310 = pneg %p41
        %p311 = pneg %p38
        %p312 = pneg %p62
        %p313 = pneg %p59
        %p314 = pneg %p83
        %p315 = pneg %p80
        %p316 = pneg %p104
        %p317 = pneg %p101
        %p318 = pneg %p125
        %p319 = pneg %p122
        %s320 = smul.u32 16, %s20
        %s321 = ssub.s32 63, %s320
        %p322 = scmp.lt.s32.totalorder %s321, 16
        %s323 = scalar_select %p322, %s321, 16
        %s324 = smul.u32 128, %s323
        %p325 = scmp.lt.s32.totalorder %s320, 62
        %s326 = scalar_select %p325, %s320, 62
        %s327 = smul.addr %s326, 8
        %s328 = scalar_lea.vmem %s5, %s327
        %p329 = pneg %p151
        %p330 = pneg %p148
        %p331 = pneg %p177
        %p332 = pneg %p174
        %s333 = sand.u32 %s164, 1
        %s334 = sand.u32 %s164, 1
        %s335 = smul.addr %s334, 128
        %s336 = scalar_lea.vmem [#allocation2], %s335
        %p337 = pneg %p203
        %p338 = pneg %p200
        %s339 = sand.u32 %s190, 1
        %s340 = sand.u32 %s190, 1
        %s341 = smul.addr %s340, 128
        %s342 = scalar_lea.vmem [#allocation3], %s341
        %p343 = pneg %p229
        %p344 = pneg %p226
        %s345 = sand.u32 %s216, 1
        %s346 = sand.u32 %s216, 1
        %s347 = smul.addr %s346, 128
        %s348 = scalar_lea.vmem [#allocation4], %s347
        %s349 = smul.u32 16, %s20
        %s350 = ssub.s32 63, %s349
        %p351 = scmp.lt.s32.totalorder %s350, 16
        %s352 = scalar_select %p351, %s350, 16
        %s353 = smul.u32 128, %s352
        %p354 = scmp.lt.s32.totalorder %s349, 62
        %s355 = scalar_select %p354, %s349, 62
        %s356 = smul.addr %s355, 8
        %s357 = scalar_lea.vmem %s0, %s356
        %s358 = smul.u32 16, %s20
        %s359 = ssub.s32 63, %s358
        %p360 = scmp.lt.s32.totalorder %s359, 16
        %s361 = scalar_select %p360, %s359, 16
        %s362 = smul.u32 128, %s361
        %s363 = smul.u32 16, %s20
        %s364 = ssub.s32 63, %s363
        %p365 = scmp.lt.s32.totalorder %s364, 16
        %s366 = scalar_select %p365, %s364, 16
        %s367 = smul.u32 128, %s366
        %p368 = scmp.lt.s32.totalorder %s363, 62
        %s369 = scalar_select %p368, %s363, 62
        %s370 = smul.addr %s369, 8
        %s371 = scalar_lea.vmem %s5, %s370
        %s372 = smul.u32 16, %s20
        %s373 = ssub.s32 63, %s372
        %p374 = scmp.lt.s32.totalorder %s373, 16
        %s375 = scalar_select %p374, %s373, 16
        %s376 = smul.u32 128, %s375
        %s377 = smul.u32 16, %s20
        %s378 = ssub.s32 63, %s377
        %p379 = scmp.lt.s32.totalorder %s378, 16
        %s380 = scalar_select %p379, %s378, 16
        %s381 = smul.u32 128, %s380
        %s382 = smul.u32 16, %s20
        %s383 = ssub.s32 63, %s382
        %p384 = scmp.lt.s32.totalorder %s383, 16
        %s385 = scalar_select %p384, %s383, 16
        %s386 = smul.u32 128, %s385
        %s387 = smul.u32 16, %s20
        %s388 = ssub.s32 63, %s387
        %p389 = scmp.lt.s32.totalorder %s388, 16
        %s390 = scalar_select %p389, %s388, 16
        %s391 = smul.u32 128, %s390
        %v392 = vld [vmem:[%s357] sm:$0xff]
        %v393 = vld [vmem:[%s357 + $0x8] sm:$0xff]
        %v394 = vld [vmem:[%s357 + $0x10] sm:$0xff]
        %v395 = vld [vmem:[%s357 + $0x18] sm:$0xff]
        %v396 = vld [vmem:[%s357 + $0x20] sm:$0xff]
        %v397 = vld [vmem:[%s357 + $0x28] sm:$0xff]
        %v398 = vld [vmem:[%s357 + $0x30] sm:$0xff]
        %v399 = vld [vmem:[%s357 + $0x38] sm:$0xff]
        %v400 = vld [vmem:[%s357 + $0x40] sm:$0xff]
        %v401 = vld [vmem:[%s357 + $0x48] sm:$0xff]
        %v402 = vld [vmem:[%s357 + $0x50] sm:$0xff]
        %v403 = vld [vmem:[%s357 + $0x58] sm:$0xff]
        %v404 = vld [vmem:[%s357 + $0x60] sm:$0xff]
        %v405 = vld [vmem:[%s357 + $0x68] sm:$0xff]
        %v406 = vld [vmem:[%s357 + $0x70] sm:$0xff]
        %v407 = vld [vmem:[%s357 + $0x78] sm:$0xff]
        %v408 = vld [vmem:[%s1] sm:$0xff]
        %v409 = vld [vmem:[%s1 + $0x8] sm:$0xff]
        %v410 = vld [vmem:[%s1 + $0x10] sm:$0xff]
        %v411 = vld [vmem:[%s1 + $0x18] sm:$0xff]
        %v412 = vld [vmem:[%s2] sm:$0x1]
        %v414 = vlaneseq
        %v415 = vshrl.u32 %v414, 7
        %v416 = vsub.s32 0, %v415
        %v417 = vrot.slane %v412, %v416
        %vm419 = vcmask 261120
        %v421 = vsel %vm419, %v392, 0
        %v424 = vsel %vm419, %v393, 0
        %v427 = vsel %vm419, %v394, 0
        %v430 = vsel %vm419, %v395, 0
        %v433 = vsel %vm419, %v396, 0
        %v436 = vsel %vm419, %v397, 0
        %v439 = vsel %vm419, %v398, 0
        %v442 = vsel %vm419, %v399, 0
        %v445 = vsel %vm419, %v400, 0
        %v448 = vsel %vm419, %v401, 0
        %v451 = vsel %vm419, %v402, 0
        %v454 = vsel %vm419, %v403, 0
        %v457 = vsel %vm419, %v404, 0
        %v460 = vsel %vm419, %v405, 0
        %v463 = vsel %vm419, %v406, 0
        %v466 = vsel %vm419, %v407, 0
        %468 = vmatprep.subr.mxu0 0.0
        %469 = vmatpush1.msra.mxu0 %v408
        %470 = vmatprep.subr.mxu0 0.0
        %471 = vmatpush1.msra.mxu0 %v409
        %472 = vmatprep.subr.mxu0 0.0
        %473 = vmatpush1.msra.mxu0 %v410
        %474 = vmatprep.subr.mxu0 0.0
        %475 = vmatpush1.msra.mxu0 %v411
        %476 = vmatprep.subr.mxu0 0.0
        %477 = vmatpush1.msra.mxu0 0.0
        %478 = vmatprep.subr.mxu0 0.0
        %479 = vmatpush1.msra.mxu0 0.0
        %480 = vmatprep.subr.mxu0 0.0
        %481 = vmatpush1.msra.mxu0 0.0
        %482 = vmatprep.subr.mxu0 0.0
        %483 = vmatpush1.msra.mxu0 0.0
        %484 = vmatprep.subr.mxu0 0.0
        %485 = vmatpush1.msra.mxu0 0.0
        %486 = vmatprep.subr.mxu0 0.0
        %487 = vmatpush1.msra.mxu0 0.0
        %488 = vmatprep.subr.mxu0 0.0
        %489 = vmatpush1.msra.mxu0 0.0
        %490 = vmatprep.subr.mxu0 0.0
        %491 = vmatpush1.msra.mxu0 0.0
        %492 = vmatprep.subr.mxu0 0.0
        %493 = vmatpush1.msra.mxu0 0.0
        %494 = vmatprep.subr.mxu0 0.0
        %495 = vmatpush1.msra.mxu0 0.0
        %496 = vmatprep.subr.mxu0 0.0
        %497 = vmatpush1.msra.mxu0 0.0
        %498 = vmatprep.subr.mxu0 0.0
        %499 = vmatpush1.msra.mxu0 0.0
        %500 = vmatprep.subr.mxu0 0.0
        %501 = vmatpush1.msra.mxu0 0.0
        %502 = vmatprep.subr.mxu0 0.0
        %503 = vmatpush1.msra.mxu0 0.0
        %504 = vmatprep.subr.mxu0 0.0
        %505 = vmatpush1.msra.mxu0 0.0
        %506 = vmatprep.subr.mxu0 0.0
        %507 = vmatpush1.msra.mxu0 0.0
        %508 = vmatprep.subr.mxu0 0.0
        %509 = vmatpush1.msra.mxu0 0.0
        %510 = vmatprep.subr.mxu0 0.0
        %511 = vmatpush1.msra.mxu0 0.0
        %512 = vmatprep.subr.mxu0 0.0
        %513 = vmatpush1.msra.mxu0 0.0
        %514 = vmatprep.subr.mxu0 0.0
        %515 = vmatpush1.msra.mxu0 0.0
        %516 = vmatprep.subr.mxu0 0.0
        %517 = vmatpush1.msra.mxu0 0.0
        %518 = vmatprep.subr.mxu0 0.0
        %519 = vmatpush1.msra.mxu0 0.0
        %520 = vmatprep.subr.mxu0 0.0
        %521 = vmatpush1.msra.mxu0 0.0
        %522 = vmatprep.subr.mxu0 0.0
        %523 = vmatpush1.msra.mxu0 0.0
        %524 = vmatprep.subr.mxu0 0.0
        %525 = vmatpush1.msra.mxu0 0.0
        %526 = vmatprep.subr.mxu0 0.0
        %527 = vmatpush1.msra.mxu0 0.0
        %528 = vmatprep.subr.mxu0 0.0
        %529 = vmatpush1.msra.mxu0 0.0
        %530 = vmatprep.subr.mxu0 0.0
        %531 = vmatpush1.msra.mxu0 0.0
        %532 = vmatprep.mubr.f32.mxu0 0.0
        %533 = vmatmul.mubr.f32.gmra.mrb[0].mxu0 %v421
        %v534 = vpop.f32.mrb[0].mxu0
        %v535 = vadd.f32 %v417, %v534
        %v536 = vpop.f32.mrb[0].mxu0
        %537 = vmatprep.mubr.f32.mxu0 0.0
        %538 = vmatmul.mubr.f32.gmra.mrb[0].mxu0 %v424
        %v539 = vpop.f32.mrb[0].mxu0
        %v540 = vadd.f32 %v417, %v539
        %v541 = vpop.f32.mrb[0].mxu0
        %542 = vmatprep.mubr.f32.mxu0 0.0
        %543 = vmatmul.mubr.f32.gmra.mrb[0].mxu0 %v427
        %v544 = vpop.f32.mrb[0].mxu0
        %v545 = vadd.f32 %v417, %v544
        %v546 = vpop.f32.mrb[0].mxu0
        %547 = vmatprep.mubr.f32.mxu0 0.0
        %548 = vmatmul.mubr.f32.gmra.mrb[0].mxu0 %v430
        %v549 = vpop.f32.mrb[0].mxu0
        %v550 = vadd.f32 %v417, %v549
        %v551 = vpop.f32.mrb[0].mxu0
        %552 = vmatprep.mubr.f32.mxu0 0.0
        %553 = vmatmul.mubr.f32.gmra.mrb[0].mxu0 %v433
        %v554 = vpop.f32.mrb[0].mxu0
        %v555 = vadd.f32 %v417, %v554
        %v556 = vpop.f32.mrb[0].mxu0
        %557 = vmatprep.mubr.f32.mxu0 0.0
        %558 = vmatmul.mubr.f32.gmra.mrb[0].mxu0 %v436
        %v559 = vpop.f32.mrb[0].mxu0
        %v560 = vadd.f32 %v417, %v559
        %v561 = vpop.f32.mrb[0].mxu0
        %562 = vmatprep.mubr.f32.mxu0 0.0
        %563 = vmatmul.mubr.f32.gmra.mrb[0].mxu0 %v439
        %v564 = vpop.f32.mrb[0].mxu0
        %v565 = vadd.f32 %v417, %v564
        %v566 = vpop.f32.mrb[0].mxu0
        %567 = vmatprep.mubr.f32.mxu0 0.0
        %568 = vmatmul.mubr.f32.gmra.mrb[0].mxu0 %v442
        %v569 = vpop.f32.mrb[0].mxu0
        %v570 = vadd.f32 %v417, %v569
        %v571 = vpop.f32.mrb[0].mxu0
        %572 = vmatprep.mubr.f32.mxu0 0.0
        %573 = vmatmul.mubr.f32.gmra.mrb[0].mxu0 %v445
        %v574 = vpop.f32.mrb[0].mxu0
        %v575 = vadd.f32 %v417, %v574
        %v576 = vpop.f32.mrb[0].mxu0
        %577 = vmatprep.mubr.f32.mxu0 0.0
        %578 = vmatmul.mubr.f32.gmra.mrb[0].mxu0 %v448
        %v579 = vpop.f32.mrb[0].mxu0
        %v580 = vadd.f32 %v417, %v579
        %v581 = vpop.f32.mrb[0].mxu0
        %582 = vmatprep.mubr.f32.mxu0 0.0
        %583 = vmatmul.mubr.f32.gmra.mrb[0].mxu0 %v451
        %v584 = vpop.f32.mrb[0].mxu0
        %v585 = vadd.f32 %v417, %v584
        %v586 = vpop.f32.mrb[0].mxu0
        %587 = vmatprep.mubr.f32.mxu0 0.0
        %588 = vmatmul.mubr.f32.gmra.mrb[0].mxu0 %v454
        %v589 = vpop.f32.mrb[0].mxu0
        %v590 = vadd.f32 %v417, %v589
        %v591 = vpop.f32.mrb[0].mxu0
        %592 = vmatprep.mubr.f32.mxu0 0.0
        %593 = vmatmul.mubr.f32.gmra.mrb[0].mxu0 %v457
        %v594 = vpop.f32.mrb[0].mxu0
        %v595 = vadd.f32 %v417, %v594
        %v596 = vpop.f32.mrb[0].mxu0
        %597 = vmatprep.mubr.f32.mxu0 0.0
        %598 = vmatmul.mubr.f32.gmra.mrb[0].mxu0 %v460
        %v599 = vpop.f32.mrb[0].mxu0
        %v600 = vadd.f32 %v417, %v599
        %v601 = vpop.f32.mrb[0].mxu0
        %602 = vmatprep.mubr.f32.mxu0 0.0
        %603 = vmatmul.mubr.f32.gmra.mrb[0].mxu0 %v463
        %v604 = vpop.f32.mrb[0].mxu0
        %v605 = vadd.f32 %v417, %v604
        %v606 = vpop.f32.mrb[0].mxu0
        %607 = vmatprep.mubr.f32.mxu0 0.0
        %608 = vmatmul.mubr.f32.gmra.mrb[0].mxu0 %v466
        %v609 = vpop.f32.mrb[0].mxu0
        %v610 = vadd.f32 %v417, %v609
        %v611 = vpop.f32.mrb[0].mxu0
        %612 = vdwg.mxu0
        %v613 = vld [vmem:[%s3] sm:$0xff]
        %v614 = vld [vmem:[%s3 + $0x8] sm:$0xff]
        %v615 = vld [vmem:[%s3 + $0x10] sm:$0xff]
        %v616 = vld [vmem:[%s3 + $0x18] sm:$0xff]
        %v617 = vld [vmem:[%s4] sm:$0x1]
        %v619 = vlaneseq
        %v620 = vshrl.u32 %v619, 7
        %v621 = vsub.s32 0, %v620
        %v622 = vrot.slane %v617, %v621
        %624 = vmatprep.subr.mxu0 0.0
        %625 = vmatpush1.msra.mxu0 %v613
        %626 = vmatprep.subr.mxu0 0.0
        %627 = vmatpush1.msra.mxu0 %v614
        %628 = vmatprep.subr.mxu0 0.0
        %629 = vmatpush1.msra.mxu0 %v615
        %630 = vmatprep.subr.mxu0 0.0
        %631 = vmatpush1.msra.mxu0 %v616
        %632 = vmatprep.subr.mxu0 0.0
        %633 = vmatpush1.msra.mxu0 0.0
        %634 = vmatprep.subr.mxu0 0.0
        %635 = vmatpush1.msra.mxu0 0.0
        %636 = vmatprep.subr.mxu0 0.0
        %637 = vmatpush1.msra.mxu0 0.0
        %638 = vmatprep.subr.mxu0 0.0
        %639 = vmatpush1.msra.mxu0 0.0
        %640 = vmatprep.subr.mxu0 0.0
        %641 = vmatpush1.msra.mxu0 0.0
        %642 = vmatprep.subr.mxu0 0.0
        %643 = vmatpush1.msra.mxu0 0.0
        %644 = vmatprep.subr.mxu0 0.0
        %645 = vmatpush1.msra.mxu0 0.0
        %646 = vmatprep.subr.mxu0 0.0
        %647 = vmatpush1.msra.mxu0 0.0
        %648 = vmatprep.subr.mxu0 0.0
        %649 = vmatpush1.msra.mxu0 0.0
        %650 = vmatprep.subr.mxu0 0.0
        %651 = vmatpush1.msra.mxu0 0.0
        %652 = vmatprep.subr.mxu0 0.0
        %653 = vmatpush1.msra.mxu0 0.0
        %654 = vmatprep.subr.mxu0 0.0
        %655 = vmatpush1.msra.mxu0 0.0
        %656 = vmatprep.subr.mxu0 0.0
        %657 = vmatpush1.msra.mxu0 0.0
        %658 = vmatprep.subr.mxu0 0.0
        %659 = vmatpush1.msra.mxu0 0.0
        %660 = vmatprep.subr.mxu0 0.0
        %661 = vmatpush1.msra.mxu0 0.0
        %662 = vmatprep.subr.mxu0 0.0
        %663 = vmatpush1.msra.mxu0 0.0
        %664 = vmatprep.subr.mxu0 0.0
        %665 = vmatpush1.msra.mxu0 0.0
        %666 = vmatprep.subr.mxu0 0.0
        %667 = vmatpush1.msra.mxu0 0.0
        %668 = vmatprep.subr.mxu0 0.0
        %669 = vmatpush1.msra.mxu0 0.0
        %670 = vmatprep.subr.mxu0 0.0
        %671 = vmatpush1.msra.mxu0 0.0
        %672 = vmatprep.subr.mxu0 0.0
        %673 = vmatpush1.msra.mxu0 0.0
        %674 = vmatprep.subr.mxu0 0.0
        %675 = vmatpush1.msra.mxu0 0.0
        %676 = vmatprep.subr.mxu0 0.0
        %677 = vmatpush1.msra.mxu0 0.0
        %678 = vmatprep.subr.mxu0 0.0
        %679 = vmatpush1.msra.mxu0 0.0
        %680 = vmatprep.subr.mxu0 0.0
        %681 = vmatpush1.msra.mxu0 0.0
        %682 = vmatprep.subr.mxu0 0.0
        %683 = vmatpush1.msra.mxu0 0.0
        %684 = vmatprep.subr.mxu0 0.0
        %685 = vmatpush1.msra.mxu0 0.0
        %686 = vmatprep.subr.mxu0 0.0
        %687 = vmatpush1.msra.mxu0 0.0
        %688 = vmatprep.mubr.f32.mxu0 0.0
        %689 = vmatmul.mubr.f32.gmra.mrb[0].mxu0 %v421
        %v690 = vpop.f32.mrb[0].mxu0
        %v691 = vadd.f32 %v622, %v690
        %v692 = vpop.f32.mrb[0].mxu0
        %693 = vmatprep.mubr.f32.mxu0 0.0
        %694 = vmatmul.mubr.f32.gmra.mrb[0].mxu0 %v424
        %v695 = vpop.f32.mrb[0].mxu0
        %v696 = vadd.f32 %v622, %v695
        %v697 = vpop.f32.mrb[0].mxu0
        %698 = vmatprep.mubr.f32.mxu0 0.0
        %699 = vmatmul.mubr.f32.gmra.mrb[0].mxu0 %v427
        %v700 = vpop.f32.mrb[0].mxu0
        %v701 = vadd.f32 %v622, %v700
        %v702 = vpop.f32.mrb[0].mxu0
        %703 = vmatprep.mubr.f32.mxu0 0.0
        %704 = vmatmul.mubr.f32.gmra.mrb[0].mxu0 %v430
        %v705 = vpop.f32.mrb[0].mxu0
        %v706 = vadd.f32 %v622, %v705
        %v707 = vpop.f32.mrb[0].mxu0
        %708 = vmatprep.mubr.f32.mxu0 0.0
        %709 = vmatmul.mubr.f32.gmra.mrb[0].mxu0 %v433
        %v710 = vpop.f32.mrb[0].mxu0
        %v711 = vadd.f32 %v622, %v710
        %v712 = vpop.f32.mrb[0].mxu0
        %713 = vmatprep.mubr.f32.mxu0 0.0
        %714 = vmatmul.mubr.f32.gmra.mrb[0].mxu0 %v436
        %v715 = vpop.f32.mrb[0].mxu0
        %v716 = vadd.f32 %v622, %v715
        %v717 = vpop.f32.mrb[0].mxu0
        %718 = vmatprep.mubr.f32.mxu0 0.0
        %719 = vmatmul.mubr.f32.gmra.mrb[0].mxu0 %v439
        %v720 = vpop.f32.mrb[0].mxu0
        %v721 = vadd.f32 %v622, %v720
        %v722 = vpop.f32.mrb[0].mxu0
        %723 = vmatprep.mubr.f32.mxu0 0.0
        %724 = vmatmul.mubr.f32.gmra.mrb[0].mxu0 %v442
        %v725 = vpop.f32.mrb[0].mxu0
        %v726 = vadd.f32 %v622, %v725
        %v727 = vpop.f32.mrb[0].mxu0
        %728 = vmatprep.mubr.f32.mxu0 0.0
        %729 = vmatmul.mubr.f32.gmra.mrb[0].mxu0 %v445
        %v730 = vpop.f32.mrb[0].mxu0
        %v731 = vadd.f32 %v622, %v730
        %v732 = vpop.f32.mrb[0].mxu0
        %733 = vmatprep.mubr.f32.mxu0 0.0
        %734 = vmatmul.mubr.f32.gmra.mrb[0].mxu0 %v448
        %v735 = vpop.f32.mrb[0].mxu0
        %v736 = vadd.f32 %v622, %v735
        %v737 = vpop.f32.mrb[0].mxu0
        %738 = vmatprep.mubr.f32.mxu0 0.0
        %739 = vmatmul.mubr.f32.gmra.mrb[0].mxu0 %v451
        %v740 = vpop.f32.mrb[0].mxu0
        %v741 = vadd.f32 %v622, %v740
        %v742 = vpop.f32.mrb[0].mxu0
        %743 = vmatprep.mubr.f32.mxu0 0.0
        %744 = vmatmul.mubr.f32.gmra.mrb[0].mxu0 %v454
        %v745 = vpop.f32.mrb[0].mxu0
        %v746 = vadd.f32 %v622, %v745
        %v747 = vpop.f32.mrb[0].mxu0
        %748 = vmatprep.mubr.f32.mxu0 0.0
        %749 = vmatmul.mubr.f32.gmra.mrb[0].mxu0 %v457
        %v750 = vpop.f32.mrb[0].mxu0
        %v751 = vadd.f32 %v622, %v750
        %v752 = vpop.f32.mrb[0].mxu0
        %753 = vmatprep.mubr.f32.mxu0 0.0
        %754 = vmatmul.mubr.f32.gmra.mrb[0].mxu0 %v460
        %v755 = vpop.f32.mrb[0].mxu0
        %v756 = vadd.f32 %v622, %v755
        %v757 = vpop.f32.mrb[0].mxu0
        %758 = vmatprep.mubr.f32.mxu0 0.0
        %759 = vmatmul.mubr.f32.gmra.mrb[0].mxu0 %v463
        %v760 = vpop.f32.mrb[0].mxu0
        %v761 = vadd.f32 %v622, %v760
        %v762 = vpop.f32.mrb[0].mxu0
        %763 = vmatprep.mubr.f32.mxu0 0.0
        %764 = vmatmul.mubr.f32.gmra.mrb[0].mxu0 %v466
        %v765 = vpop.f32.mrb[0].mxu0
        %v766 = vadd.f32 %v622, %v765
        %v767 = vpop.f32.mrb[0].mxu0
        %768 = vdwg.mxu0
        %v769 = vmul.f32 %v691, 1.442695
        %v770 = vpow.pop %v769
        %v771 = vmul.f32 %v696, 1.442695
        %v772 = vpow.pop %v771
        %v773 = vmul.f32 %v701, 1.442695
        %v774 = vpow.pop %v773
        %v775 = vmul.f32 %v706, 1.442695
        %v776 = vpow.pop %v775
        %v777 = vmul.f32 %v711, 1.442695
        %v778 = vpow.pop %v777
        %v779 = vmul.f32 %v716, 1.442695
        %v780 = vpow.pop %v779
        %v781 = vmul.f32 %v721, 1.442695
        %v782 = vpow.pop %v781
        %v783 = vmul.f32 %v726, 1.442695
        %v784 = vpow.pop %v783
        %v785 = vmul.f32 %v731, 1.442695
        %v786 = vpow.pop %v785
        %v787 = vmul.f32 %v736, 1.442695
        %v788 = vpow.pop %v787
        %v789 = vmul.f32 %v741, 1.442695
        %v790 = vpow.pop %v789
        %v791 = vmul.f32 %v746, 1.442695
        %v792 = vpow.pop %v791
        %v793 = vmul.f32 %v751, 1.442695
        %v794 = vpow.pop %v793
        %v795 = vmul.f32 %v756, 1.442695
        %v796 = vpow.pop %v795
        %v797 = vmul.f32 %v761, 1.442695
        %v798 = vpow.pop %v797
        %v799 = vmul.f32 %v766, 1.442695
        %v800 = vpow.pop %v799
        %v801 = vmul.f32 %v770, %v770
        %v802 = vmul.f32 %v772, %v772
        %v803 = vmul.f32 %v774, %v774
        %v804 = vmul.f32 %v776, %v776
        %v805 = vmul.f32 %v778, %v778
        %v806 = vmul.f32 %v780, %v780
        %v807 = vmul.f32 %v782, %v782
        %v808 = vmul.f32 %v784, %v784
        %v809 = vmul.f32 %v786, %v786
        %v810 = vmul.f32 %v788, %v788
        %v811 = vmul.f32 %v790, %v790
        %v812 = vmul.f32 %v792, %v792
        %v813 = vmul.f32 %v794, %v794
        %v814 = vmul.f32 %v796, %v796
        %v815 = vmul.f32 %v798, %v798
        %v816 = vmul.f32 %v800, %v800
        %v817 = vld [vmem:[%s371] sm:$0xff]
        %v818 = vld [vmem:[%s371 + $0x8] sm:$0xff]
        %v819 = vld [vmem:[%s371 + $0x10] sm:$0xff]
        %v820 = vld [vmem:[%s371 + $0x18] sm:$0xff]
        %v821 = vld [vmem:[%s371 + $0x20] sm:$0xff]
        %v822 = vld [vmem:[%s371 + $0x28] sm:$0xff]
        %v823 = vld [vmem:[%s371 + $0x30] sm:$0xff]
        %v824 = vld [vmem:[%s371 + $0x38] sm:$0xff]
        %v825 = vld [vmem:[%s371 + $0x40] sm:$0xff]
        %v826 = vld [vmem:[%s371 + $0x48] sm:$0xff]
        %v827 = vld [vmem:[%s371 + $0x50] sm:$0xff]
        %v828 = vld [vmem:[%s371 + $0x58] sm:$0xff]
        %v829 = vld [vmem:[%s371 + $0x60] sm:$0xff]
        %v830 = vld [vmem:[%s371 + $0x68] sm:$0xff]
        %v831 = vld [vmem:[%s371 + $0x70] sm:$0xff]
        %v832 = vld [vmem:[%s371 + $0x78] sm:$0xff]
        %v833 = vmul.f32 %v770, %v817
        %v834 = vmul.f32 %v772, %v818
        %v835 = vmul.f32 %v774, %v819
        %v836 = vmul.f32 %v776, %v820
        %v837 = vmul.f32 %v778, %v821
        %v838 = vmul.f32 %v780, %v822
        %v839 = vmul.f32 %v782, %v823
        %v840 = vmul.f32 %v784, %v824
        %v841 = vmul.f32 %v786, %v825
        %v842 = vmul.f32 %v788, %v826
        %v843 = vmul.f32 %v790, %v827
        %v844 = vmul.f32 %v792, %v828
        %v845 = vmul.f32 %v794, %v829
        %v846 = vmul.f32 %v796, %v830
        %v847 = vmul.f32 %v798, %v831
        %v848 = vmul.f32 %v800, %v832
        %v849 = vadd.f32 %v535, %v833
        %v850 = vadd.f32 %v540, %v834
        %v851 = vadd.f32 %v545, %v835
        %v852 = vadd.f32 %v550, %v836
        %v853 = vadd.f32 %v555, %v837
        %v854 = vadd.f32 %v560, %v838
        %v855 = vadd.f32 %v565, %v839
        %v856 = vadd.f32 %v570, %v840
        %v857 = vadd.f32 %v575, %v841
        %v858 = vadd.f32 %v580, %v842
        %v859 = vadd.f32 %v585, %v843
        %v860 = vadd.f32 %v590, %v844
        %v861 = vadd.f32 %v595, %v845
        %v862 = vadd.f32 %v600, %v846
        %v863 = vadd.f32 %v605, %v847
        %v864 = vadd.f32 %v610, %v848
        %vm865 = vcmask 130048
        %866 = vst.msk [vmem:[%s336] sm:$0xff] %vm865, %v535
        %867 = vst.msk [vmem:[%s336 + $0x8] sm:$0xff] %vm865, %v540
        %868 = vst.msk [vmem:[%s336 + $0x10] sm:$0xff] %vm865, %v545
        %869 = vst.msk [vmem:[%s336 + $0x18] sm:$0xff] %vm865, %v550
        %870 = vst.msk [vmem:[%s336 + $0x20] sm:$0xff] %vm865, %v555
        %871 = vst.msk [vmem:[%s336 + $0x28] sm:$0xff] %vm865, %v560
        %872 = vst.msk [vmem:[%s336 + $0x30] sm:$0xff] %vm865, %v565
        %873 = vst.msk [vmem:[%s336 + $0x38] sm:$0xff] %vm865, %v570
        %874 = vst.msk [vmem:[%s336 + $0x40] sm:$0xff] %vm865, %v575
        %875 = vst.msk [vmem:[%s336 + $0x48] sm:$0xff] %vm865, %v580
        %876 = vst.msk [vmem:[%s336 + $0x50] sm:$0xff] %vm865, %v585
        %877 = vst.msk [vmem:[%s336 + $0x58] sm:$0xff] %vm865, %v590
        %878 = vst.msk [vmem:[%s336 + $0x60] sm:$0xff] %vm865, %v595
        %879 = vst.msk [vmem:[%s336 + $0x68] sm:$0xff] %vm865, %v600
        %880 = vst.msk [vmem:[%s336 + $0x70] sm:$0xff] %vm865, %v605
        %881 = vst.msk [vmem:[%s336 + $0x78] sm:$0xff] %vm865, %v610
        %882 = vst.msk [vmem:[%s342] sm:$0xff] %vm865, %v801
        %883 = vst.msk [vmem:[%s342 + $0x8] sm:$0xff] %vm865, %v802
        %884 = vst.msk [vmem:[%s342 + $0x10] sm:$0xff] %vm865, %v803
        %885 = vst.msk [vmem:[%s342 + $0x18] sm:$0xff] %vm865, %v804
        %886 = vst.msk [vmem:[%s342 + $0x20] sm:$0xff] %vm865, %v805
        %887 = vst.msk [vmem:[%s342 + $0x28] sm:$0xff] %vm865, %v806
        %888 = vst.msk [vmem:[%s342 + $0x30] sm:$0xff] %vm865, %v807
        %889 = vst.msk [vmem:[%s342 + $0x38] sm:$0xff] %vm865, %v808
        %890 = vst.msk [vmem:[%s342 + $0x40] sm:$0xff] %vm865, %v809
        %891 = vst.msk [vmem:[%s342 + $0x48] sm:$0xff] %vm865, %v810
        %892 = vst.msk [vmem:[%s342 + $0x50] sm:$0xff] %vm865, %v811
        %893 = vst.msk [vmem:[%s342 + $0x58] sm:$0xff] %vm865, %v812
        %894 = vst.msk [vmem:[%s342 + $0x60] sm:$0xff] %vm865, %v813
        %895 = vst.msk [vmem:[%s342 + $0x68] sm:$0xff] %vm865, %v814
        %896 = vst.msk [vmem:[%s342 + $0x70] sm:$0xff] %vm865, %v815
        %897 = vst.msk [vmem:[%s342 + $0x78] sm:$0xff] %vm865, %v816
        %898 = vst.msk [vmem:[%s348] sm:$0xff] %vm865, %v849
        %899 = vst.msk [vmem:[%s348 + $0x8] sm:$0xff] %vm865, %v850
        %900 = vst.msk [vmem:[%s348 + $0x10] sm:$0xff] %vm865, %v851
        %901 = vst.msk [vmem:[%s348 + $0x18] sm:$0xff] %vm865, %v852
        %902 = vst.msk [vmem:[%s348 + $0x20] sm:$0xff] %vm865, %v853
        %903 = vst.msk [vmem:[%s348 + $0x28] sm:$0xff] %vm865, %v854
        %904 = vst.msk [vmem:[%s348 + $0x30] sm:$0xff] %vm865, %v855
        %905 = vst.msk [vmem:[%s348 + $0x38] sm:$0xff] %vm865, %v856
        %906 = vst.msk [vmem:[%s348 + $0x40] sm:$0xff] %vm865, %v857
        %907 = vst.msk [vmem:[%s348 + $0x48] sm:$0xff] %vm865, %v858
        %908 = vst.msk [vmem:[%s348 + $0x50] sm:$0xff] %vm865, %v859
        %909 = vst.msk [vmem:[%s348 + $0x58] sm:$0xff] %vm865, %v860
        %910 = vst.msk [vmem:[%s348 + $0x60] sm:$0xff] %vm865, %v861
        %911 = vst.msk [vmem:[%s348 + $0x68] sm:$0xff] %vm865, %v862
        %912 = vst.msk [vmem:[%s348 + $0x70] sm:$0xff] %vm865, %v863
        %913 = vst.msk [vmem:[%s348 + $0x78] sm:$0xff] %vm865, %v864
        %s914 = sand.u32 %s164, 1
        %s915 = sand.u32 %s164, 1
        %s916 = smul.addr %s915, 128
        %s917 = scalar_lea.vmem [#allocation2], %s916
        %s918 = sand.u32 %s190, 1
        %s919 = sand.u32 %s190, 1
        %s920 = smul.addr %s919, 128
        %s921 = scalar_lea.vmem [#allocation3], %s920
        %s922 = sand.u32 %s216, 1
        %s923 = sand.u32 %s216, 1
        %s924 = smul.addr %s923, 128
        %s925 = scalar_lea.vmem [#allocation4], %s924
        // Predicated region
        $region45: #{tpu_custom_call.1} parent=43 // pred_check
          %p926 = pneg %p174
        $region46: #{tpu_custom_call.1} parent=43 // pred_check_branch
          %928 = sbr.rel (%p926) target = $region48
        $region47: #{tpu_custom_call.1} parent=43 // pred_region
          %s929 = smul.u32 16, %s20
          %s930 = ssub.s32 63, %s929
          %p931 = scmp.lt.s32.totalorder %s930, 16
          %s932 = scalar_select %p931, %s930, 16
          %s933 = smul.u32 128, %s932
          %p934 = scmp.ne.s32.totalorder 0, %s933
          %s935 = smul.addr %s929, 8
          %s936 = scalar_lea.vmem %s6, %s935
          // Predicated region
          $region49: #{tpu_custom_call.1} parent=47 // pred_check
            %p937 = pneg %p934
          $region50: #{tpu_custom_call.1} parent=47 // pred_check_branch
            %939 = sbr.rel (%p937) target = $region52
          $region51: #{tpu_custom_call.1} parent=47 // pred_region
            // Predicated region
            $region53: #{tpu_custom_call.1} parent=51 // pred_check
              _
            $region54: #{tpu_custom_call.1} parent=51 // pred_check_branch
              %941 = sbr.rel (0) target = $region56
            $region55: #{tpu_custom_call.1} parent=51 // pred_region
              // Predicated region
              $region75: #{tpu_custom_call.1} parent=55 // pred_check
                _
              $region76: #{tpu_custom_call.1} parent=55 // pred_check_branch
                %1020 = sbr.rel (0) target = $region78
              $region77: #{tpu_custom_call.1} parent=55 // pred_region
                %s1021 = sshrl.u32 %s932, 4
                // While loop
                $region79: #{tpu_custom_call.1} parent=77 // loop_pre_header
                  _
                $region80: #{tpu_custom_call.1} parent=77 // loop_header
                  %s1023 = sphi 0, %s1025
                  %p1024 = scmp.ge.s32.totalorder %s1023, %s1021
                  %s1028 = sphi 0, %s1065
                  %s1029 = sphi %s917, %s1068
                  %s1030 = sphi %s936, %s1069
                $region81: #{tpu_custom_call.1} parent=77 // loop_header_branch
                  %1027 = sbr.rel (%p1024) target = $region85
                $region82: #{tpu_custom_call.1} parent=77 // loop_body
                  %v1031 = vld [vmem:[%s1029] sm:$0xff]
                  %1032 = vst [vmem:[%s1030] sm:$0xff] %v1031
                  %v1033 = vld [vmem:[%s1029 + $0x8] sm:$0xff]
                  %1034 = vst [vmem:[%s1030 + $0x8] sm:$0xff] %v1033
                  %v1035 = vld [vmem:[%s1029 + $0x10] sm:$0xff]
                  %1036 = vst [vmem:[%s1030 + $0x10] sm:$0xff] %v1035
                  %v1037 = vld [vmem:[%s1029 + $0x18] sm:$0xff]
                  %1038 = vst [vmem:[%s1030 + $0x18] sm:$0xff] %v1037
                  %v1039 = vld [vmem:[%s1029 + $0x20] sm:$0xff]
                  %1040 = vst [vmem:[%s1030 + $0x20] sm:$0xff] %v1039
                  %v1041 = vld [vmem:[%s1029 + $0x28] sm:$0xff]
                  %1042 = vst [vmem:[%s1030 + $0x28] sm:$0xff] %v1041
                  %v1043 = vld [vmem:[%s1029 + $0x30] sm:$0xff]
                  %1044 = vst [vmem:[%s1030 + $0x30] sm:$0xff] %v1043
                  %v1045 = vld [vmem:[%s1029 + $0x38] sm:$0xff]
                  %1046 = vst [vmem:[%s1030 + $0x38] sm:$0xff] %v1045
                  %v1047 = vld [vmem:[%s1029 + $0x40] sm:$0xff]
                  %1048 = vst [vmem:[%s1030 + $0x40] sm:$0xff] %v1047
                  %v1049 = vld [vmem:[%s1029 + $0x48] sm:$0xff]
                  %1050 = vst [vmem:[%s1030 + $0x48] sm:$0xff] %v1049
                  %v1051 = vld [vmem:[%s1029 + $0x50] sm:$0xff]
                  %1052 = vst [vmem:[%s1030 + $0x50] sm:$0xff] %v1051
                  %v1053 = vld [vmem:[%s1029 + $0x58] sm:$0xff]
                  %1054 = vst [vmem:[%s1030 + $0x58] sm:$0xff] %v1053
                  %v1055 = vld [vmem:[%s1029 + $0x60] sm:$0xff]
                  %1056 = vst [vmem:[%s1030 + $0x60] sm:$0xff] %v1055
                  %v1057 = vld [vmem:[%s1029 + $0x68] sm:$0xff]
                  %1058 = vst [vmem:[%s1030 + $0x68] sm:$0xff] %v1057
                  %v1059 = vld [vmem:[%s1029 + $0x70] sm:$0xff]
                  %1060 = vst [vmem:[%s1030 + $0x70] sm:$0xff] %v1059
                  %v1061 = vld [vmem:[%s1029 + $0x78] sm:$0xff]
                  %1062 = vst [vmem:[%s1030 + $0x78] sm:$0xff] %v1061
                  %s1063 = sadd.s32 1, %s1028
                  %p1064 = scmp.ge.s32.totalorder %s1063, %s1021
                  %s1065 = scalar_select %p1064, 0, %s1063
                  %s1066 = smul.u32 %s1065, 128
                  %s1067 = smul.u32 %s1065, 128
                  %s1068 = scalar_lea.vmem %s917, %s1066 [#allocation2]
                  %s1069 = scalar_lea.vmem %s936, %s1067
                $region83: #{tpu_custom_call.1} parent=77 // loop_footer
                  %s1025 = sadd.s32 %s1023, 1
                $region84: #{tpu_custom_call.1} parent=77 // loop_footer_branch
                  %1022 = sbr.rel target = $region80
                $region85: #{tpu_custom_call.1} parent=77 // loop_exit
                  _
                %s1070 = sshrl.u32 %s932, 4
                %s1071 = sand.u32 %s932, 15
                %s1072 = smul.u32 %s1070, 16
                %s1073 = smul.u32 8, %s1072
                %s1074 = scalar_lea.vmem %s917, %s1073 [#allocation2]
                %s1075 = smul.u32 8, %s1072
                %s1076 = scalar_lea.vmem %s936, %s1075
                // While loop
                $region86: #{tpu_custom_call.1} parent=77 // loop_pre_header
                  _
                $region87: #{tpu_custom_call.1} parent=77 // loop_header
                  %s1078 = sphi 0, %s1080
                  %p1079 = scmp.ge.s32.totalorder %s1078, %s1071
                  %s1083 = sphi 0, %s1090
                  %s1084 = sphi %s1074, %s1093
                  %s1085 = sphi %s1076, %s1094
                $region88: #{tpu_custom_call.1} parent=77 // loop_header_branch
                  %1082 = sbr.rel (%p1079) target = $region92
                $region89: #{tpu_custom_call.1} parent=77 // loop_body
                  %v1086 = vld [vmem:[%s1084] sm:$0xff]
                  %1087 = vst [vmem:[%s1085] sm:$0xff] %v1086
                  %s1088 = sadd.s32 1, %s1083
                  %p1089 = scmp.ge.s32.totalorder %s1088, %s1071
                  %s1090 = scalar_select %p1089, 0, %s1088
                  %s1091 = smul.u32 %s1090, 8
                  %s1092 = smul.u32 %s1090, 8
                  %s1093 = scalar_lea.vmem %s1074, %s1091 [#allocation2]
                  %s1094 = scalar_lea.vmem %s1076, %s1092
                $region90: #{tpu_custom_call.1} parent=77 // loop_footer
                  %s1080 = sadd.s32 %s1078, 1
                $region91: #{tpu_custom_call.1} parent=77 // loop_footer_branch
                  %1077 = sbr.rel target = $region87
                $region92: #{tpu_custom_call.1} parent=77 // loop_exit
                  _
              $region78: #{tpu_custom_call.1} parent=55 // pred_fallthru
                _
              // Predicated region
              $region93: #{tpu_custom_call.1} parent=55 // pred_check
                _
              $region94: #{tpu_custom_call.1} parent=55 // pred_check_branch
                %1096 = sbr.rel target = $region96
              $region95: #{tpu_custom_call.1} parent=55 // pred_region
                _
              $region96: #{tpu_custom_call.1} parent=55 // pred_fallthru
                _
            $region56: #{tpu_custom_call.1} parent=51 // pred_fallthru
              _
            // Predicated region
            $region57: #{tpu_custom_call.1} parent=51 // pred_check
              _
            $region58: #{tpu_custom_call.1} parent=51 // pred_check_branch
              %943 = sbr.rel target = $region60
            $region59: #{tpu_custom_call.1} parent=51 // pred_region
              %s945 = sshrl.u32 %s932, 4
              // While loop
              $region61: #{tpu_custom_call.1} parent=59 // loop_pre_header
                _
              $region62: #{tpu_custom_call.1} parent=59 // loop_header
                %s947 = sphi 0, %s949
                %p948 = scmp.ge.s32.totalorder %s947, %s945
                %s952 = sphi 0, %s989
                %s953 = sphi %s917, %s992
                %s954 = sphi %s936, %s993
              $region63: #{tpu_custom_call.1} parent=59 // loop_header_branch
                %951 = sbr.rel (%p948) target = $region67
              $region64: #{tpu_custom_call.1} parent=59 // loop_body
                %v955 = vld [vmem:[%s953] sm:$0xff]
                %956 = vst [vmem:[%s954] sm:$0xff] %v955
                %v957 = vld [vmem:[%s953 + $0x8] sm:$0xff]
                %958 = vst [vmem:[%s954 + $0x8] sm:$0xff] %v957
                %v959 = vld [vmem:[%s953 + $0x10] sm:$0xff]
                %960 = vst [vmem:[%s954 + $0x10] sm:$0xff] %v959
                %v961 = vld [vmem:[%s953 + $0x18] sm:$0xff]
                %962 = vst [vmem:[%s954 + $0x18] sm:$0xff] %v961
                %v963 = vld [vmem:[%s953 + $0x20] sm:$0xff]
                %964 = vst [vmem:[%s954 + $0x20] sm:$0xff] %v963
                %v965 = vld [vmem:[%s953 + $0x28] sm:$0xff]
                %966 = vst [vmem:[%s954 + $0x28] sm:$0xff] %v965
                %v967 = vld [vmem:[%s953 + $0x30] sm:$0xff]
                %968 = vst [vmem:[%s954 + $0x30] sm:$0xff] %v967
                %v969 = vld [vmem:[%s953 + $0x38] sm:$0xff]
                %970 = vst [vmem:[%s954 + $0x38] sm:$0xff] %v969
                %v971 = vld [vmem:[%s953 + $0x40] sm:$0xff]
                %972 = vst [vmem:[%s954 + $0x40] sm:$0xff] %v971
                %v973 = vld [vmem:[%s953 + $0x48] sm:$0xff]
                %974 = vst [vmem:[%s954 + $0x48] sm:$0xff] %v973
                %v975 = vld [vmem:[%s953 + $0x50] sm:$0xff]
                %976 = vst [vmem:[%s954 + $0x50] sm:$0xff] %v975
                %v977 = vld [vmem:[%s953 + $0x58] sm:$0xff]
                %978 = vst [vmem:[%s954 + $0x58] sm:$0xff] %v977
                %v979 = vld [vmem:[%s953 + $0x60] sm:$0xff]
                %980 = vst [vmem:[%s954 + $0x60] sm:$0xff] %v979
                %v981 = vld [vmem:[%s953 + $0x68] sm:$0xff]
                %982 = vst [vmem:[%s954 + $0x68] sm:$0xff] %v981
                %v983 = vld [vmem:[%s953 + $0x70] sm:$0xff]
                %984 = vst [vmem:[%s954 + $0x70] sm:$0xff] %v983
                %v985 = vld [vmem:[%s953 + $0x78] sm:$0xff]
                %986 = vst [vmem:[%s954 + $0x78] sm:$0xff] %v985
                %s987 = sadd.s32 1, %s952
                %p988 = scmp.ge.s32.totalorder %s987, %s945
                %s989 = scalar_select %p988, 0, %s987
                %s990 = smul.u32 %s989, 128
                %s991 = smul.u32 %s989, 128
                %s992 = scalar_lea.vmem %s917, %s990 [#allocation2]
                %s993 = scalar_lea.vmem %s936, %s991
              $region65: #{tpu_custom_call.1} parent=59 // loop_footer
                %s949 = sadd.s32 %s947, 1
              $region66: #{tpu_custom_call.1} parent=59 // loop_footer_branch
                %946 = sbr.rel target = $region62
              $region67: #{tpu_custom_call.1} parent=59 // loop_exit
                _
              %s994 = sshrl.u32 %s932, 4
              %s995 = sand.u32 %s932, 15
              %s996 = smul.u32 %s994, 16
              %s997 = smul.u32 8, %s996
              %s998 = scalar_lea.vmem %s917, %s997 [#allocation2]
              %s999 = smul.u32 8, %s996
              %s1000 = scalar_lea.vmem %s936, %s999
              // While loop
              $region68: #{tpu_custom_call.1} parent=59 // loop_pre_header
                _
              $region69: #{tpu_custom_call.1} parent=59 // loop_header
                %s1002 = sphi 0, %s1004
                %p1003 = scmp.ge.s32.totalorder %s1002, %s995
                %s1007 = sphi 0, %s1014
                %s1008 = sphi %s998, %s1017
                %s1009 = sphi %s1000, %s1018
              $region70: #{tpu_custom_call.1} parent=59 // loop_header_branch
                %1006 = sbr.rel (%p1003) target = $region74
              $region71: #{tpu_custom_call.1} parent=59 // loop_body
                %v1010 = vld [vmem:[%s1008] sm:$0xff]
                %1011 = vst [vmem:[%s1009] sm:$0xff] %v1010
                %s1012 = sadd.s32 1, %s1007
                %p1013 = scmp.ge.s32.totalorder %s1012, %s995
                %s1014 = scalar_select %p1013, 0, %s1012
                %s1015 = smul.u32 %s1014, 8
                %s1016 = smul.u32 %s1014, 8
                %s1017 = scalar_lea.vmem %s998, %s1015 [#allocation2]
                %s1018 = scalar_lea.vmem %s1000, %s1016
              $region72: #{tpu_custom_call.1} parent=59 // loop_footer
                %s1004 = sadd.s32 %s1002, 1
              $region73: #{tpu_custom_call.1} parent=59 // loop_footer_branch
                %1001 = sbr.rel target = $region69
              $region74: #{tpu_custom_call.1} parent=59 // loop_exit
                _
            $region60: #{tpu_custom_call.1} parent=51 // pred_fallthru
              _
          $region52: #{tpu_custom_call.1} parent=47 // pred_fallthru
            _
          %1097 = vnop
        $region48: #{tpu_custom_call.1} parent=43 // pred_fallthru
          _
        // Predicated region
        $region97: #{tpu_custom_call.1} parent=43 // pred_check
          %p1098 = pneg %p200
        $region98: #{tpu_custom_call.1} parent=43 // pred_check_branch
          %1100 = sbr.rel (%p1098) target = $region100
        $region99: #{tpu_custom_call.1} parent=43 // pred_region
          %s1101 = smul.u32 16, %s20
          %s1102 = ssub.s32 63, %s1101
          %p1103 = scmp.lt.s32.totalorder %s1102, 16
          %s1104 = scalar_select %p1103, %s1102, 16
          %s1105 = smul.u32 128, %s1104
          %p1106 = scmp.ne.s32.totalorder 0, %s1105
          %s1107 = smul.addr %s1101, 8
          %s1108 = scalar_lea.vmem %s7, %s1107
          // Predicated region
          $region101: #{tpu_custom_call.1} parent=99 // pred_check
            %p1109 = pneg %p1106
          $region102: #{tpu_custom_call.1} parent=99 // pred_check_branch
            %1111 = sbr.rel (%p1109) target = $region104
          $region103: #{tpu_custom_call.1} parent=99 // pred_region
            // Predicated region
            $region105: #{tpu_custom_call.1} parent=103 // pred_check
              _
            $region106: #{tpu_custom_call.1} parent=103 // pred_check_branch
              %1113 = sbr.rel (0) target = $region108
            $region107: #{tpu_custom_call.1} parent=103 // pred_region
              // Predicated region
              $region127: #{tpu_custom_call.1} parent=107 // pred_check
                _
              $region128: #{tpu_custom_call.1} parent=107 // pred_check_branch
                %1192 = sbr.rel (0) target = $region130
              $region129: #{tpu_custom_call.1} parent=107 // pred_region
                %s1193 = sshrl.u32 %s1104, 4
                // While loop
                $region131: #{tpu_custom_call.1} parent=129 // loop_pre_header
                  _
                $region132: #{tpu_custom_call.1} parent=129 // loop_header
                  %s1195 = sphi 0, %s1197
                  %p1196 = scmp.ge.s32.totalorder %s1195, %s1193
                  %s1200 = sphi 0, %s1237
                  %s1201 = sphi %s921, %s1240
                  %s1202 = sphi %s1108, %s1241
                $region133: #{tpu_custom_call.1} parent=129 // loop_header_branch
                  %1199 = sbr.rel (%p1196) target = $region137
                $region134: #{tpu_custom_call.1} parent=129 // loop_body
                  %v1203 = vld [vmem:[%s1201] sm:$0xff]
                  %1204 = vst [vmem:[%s1202] sm:$0xff] %v1203
                  %v1205 = vld [vmem:[%s1201 + $0x8] sm:$0xff]
                  %1206 = vst [vmem:[%s1202 + $0x8] sm:$0xff] %v1205
                  %v1207 = vld [vmem:[%s1201 + $0x10] sm:$0xff]
                  %1208 = vst [vmem:[%s1202 + $0x10] sm:$0xff] %v1207
                  %v1209 = vld [vmem:[%s1201 + $0x18] sm:$0xff]
                  %1210 = vst [vmem:[%s1202 + $0x18] sm:$0xff] %v1209
                  %v1211 = vld [vmem:[%s1201 + $0x20] sm:$0xff]
                  %1212 = vst [vmem:[%s1202 + $0x20] sm:$0xff] %v1211
                  %v1213 = vld [vmem:[%s1201 + $0x28] sm:$0xff]
                  %1214 = vst [vmem:[%s1202 + $0x28] sm:$0xff] %v1213
                  %v1215 = vld [vmem:[%s1201 + $0x30] sm:$0xff]
                  %1216 = vst [vmem:[%s1202 + $0x30] sm:$0xff] %v1215
                  %v1217 = vld [vmem:[%s1201 + $0x38] sm:$0xff]
                  %1218 = vst [vmem:[%s1202 + $0x38] sm:$0xff] %v1217
                  %v1219 = vld [vmem:[%s1201 + $0x40] sm:$0xff]
                  %1220 = vst [vmem:[%s1202 + $0x40] sm:$0xff] %v1219
                  %v1221 = vld [vmem:[%s1201 + $0x48] sm:$0xff]
                  %1222 = vst [vmem:[%s1202 + $0x48] sm:$0xff] %v1221
                  %v1223 = vld [vmem:[%s1201 + $0x50] sm:$0xff]
                  %1224 = vst [vmem:[%s1202 + $0x50] sm:$0xff] %v1223
                  %v1225 = vld [vmem:[%s1201 + $0x58] sm:$0xff]
                  %1226 = vst [vmem:[%s1202 + $0x58] sm:$0xff] %v1225
                  %v1227 = vld [vmem:[%s1201 + $0x60] sm:$0xff]
                  %1228 = vst [vmem:[%s1202 + $0x60] sm:$0xff] %v1227
                  %v1229 = vld [vmem:[%s1201 + $0x68] sm:$0xff]
                  %1230 = vst [vmem:[%s1202 + $0x68] sm:$0xff] %v1229
                  %v1231 = vld [vmem:[%s1201 + $0x70] sm:$0xff]
                  %1232 = vst [vmem:[%s1202 + $0x70] sm:$0xff] %v1231
                  %v1233 = vld [vmem:[%s1201 + $0x78] sm:$0xff]
                  %1234 = vst [vmem:[%s1202 + $0x78] sm:$0xff] %v1233
                  %s1235 = sadd.s32 1, %s1200
                  %p1236 = scmp.ge.s32.totalorder %s1235, %s1193
                  %s1237 = scalar_select %p1236, 0, %s1235
                  %s1238 = smul.u32 %s1237, 128
                  %s1239 = smul.u32 %s1237, 128
                  %s1240 = scalar_lea.vmem %s921, %s1238 [#allocation3]
                  %s1241 = scalar_lea.vmem %s1108, %s1239
                $region135: #{tpu_custom_call.1} parent=129 // loop_footer
                  %s1197 = sadd.s32 %s1195, 1
                $region136: #{tpu_custom_call.1} parent=129 // loop_footer_branch
                  %1194 = sbr.rel target = $region132
                $region137: #{tpu_custom_call.1} parent=129 // loop_exit
                  _
                %s1242 = sshrl.u32 %s1104, 4
                %s1243 = sand.u32 %s1104, 15
                %s1244 = smul.u32 %s1242, 16
                %s1245 = smul.u32 8, %s1244
                %s1246 = scalar_lea.vmem %s921, %s1245 [#allocation3]
                %s1247 = smul.u32 8, %s1244
                %s1248 = scalar_lea.vmem %s1108, %s1247
                // While loop
                $region138: #{tpu_custom_call.1} parent=129 // loop_pre_header
                  _
                $region139: #{tpu_custom_call.1} parent=129 // loop_header
                  %s1250 = sphi 0, %s1252
                  %p1251 = scmp.ge.s32.totalorder %s1250, %s1243
                  %s1255 = sphi 0, %s1262
                  %s1256 = sphi %s1246, %s1265
                  %s1257 = sphi %s1248, %s1266
                $region140: #{tpu_custom_call.1} parent=129 // loop_header_branch
                  %1254 = sbr.rel (%p1251) target = $region144
                $region141: #{tpu_custom_call.1} parent=129 // loop_body
                  %v1258 = vld [vmem:[%s1256] sm:$0xff]
                  %1259 = vst [vmem:[%s1257] sm:$0xff] %v1258
                  %s1260 = sadd.s32 1, %s1255
                  %p1261 = scmp.ge.s32.totalorder %s1260, %s1243
                  %s1262 = scalar_select %p1261, 0, %s1260
                  %s1263 = smul.u32 %s1262, 8
                  %s1264 = smul.u32 %s1262, 8
                  %s1265 = scalar_lea.vmem %s1246, %s1263 [#allocation3]
                  %s1266 = scalar_lea.vmem %s1248, %s1264
                $region142: #{tpu_custom_call.1} parent=129 // loop_footer
                  %s1252 = sadd.s32 %s1250, 1
                $region143: #{tpu_custom_call.1} parent=129 // loop_footer_branch
                  %1249 = sbr.rel target = $region139
                $region144: #{tpu_custom_call.1} parent=129 // loop_exit
                  _
              $region130: #{tpu_custom_call.1} parent=107 // pred_fallthru
                _
              // Predicated region
              $region145: #{tpu_custom_call.1} parent=107 // pred_check
                _
              $region146: #{tpu_custom_call.1} parent=107 // pred_check_branch
                %1268 = sbr.rel target = $region148
              $region147: #{tpu_custom_call.1} parent=107 // pred_region
                _
              $region148: #{tpu_custom_call.1} parent=107 // pred_fallthru
                _
            $region108: #{tpu_custom_call.1} parent=103 // pred_fallthru
              _
            // Predicated region
            $region109: #{tpu_custom_call.1} parent=103 // pred_check
              _
            $region110: #{tpu_custom_call.1} parent=103 // pred_check_branch
              %1115 = sbr.rel target = $region112
            $region111: #{tpu_custom_call.1} parent=103 // pred_region
              %s1117 = sshrl.u32 %s1104, 4
              // While loop
              $region113: #{tpu_custom_call.1} parent=111 // loop_pre_header
                _
              $region114: #{tpu_custom_call.1} parent=111 // loop_header
                %s1119 = sphi 0, %s1121
                %p1120 = scmp.ge.s32.totalorder %s1119, %s1117
                %s1124 = sphi 0, %s1161
                %s1125 = sphi %s921, %s1164
                %s1126 = sphi %s1108, %s1165
              $region115: #{tpu_custom_call.1} parent=111 // loop_header_branch
                %1123 = sbr.rel (%p1120) target = $region119
              $region116: #{tpu_custom_call.1} parent=111 // loop_body
                %v1127 = vld [vmem:[%s1125] sm:$0xff]
                %1128 = vst [vmem:[%s1126] sm:$0xff] %v1127
                %v1129 = vld [vmem:[%s1125 + $0x8] sm:$0xff]
                %1130 = vst [vmem:[%s1126 + $0x8] sm:$0xff] %v1129
                %v1131 = vld [vmem:[%s1125 + $0x10] sm:$0xff]
                %1132 = vst [vmem:[%s1126 + $0x10] sm:$0xff] %v1131
                %v1133 = vld [vmem:[%s1125 + $0x18] sm:$0xff]
                %1134 = vst [vmem:[%s1126 + $0x18] sm:$0xff] %v1133
                %v1135 = vld [vmem:[%s1125 + $0x20] sm:$0xff]
                %1136 = vst [vmem:[%s1126 + $0x20] sm:$0xff] %v1135
                %v1137 = vld [vmem:[%s1125 + $0x28] sm:$0xff]
                %1138 = vst [vmem:[%s1126 + $0x28] sm:$0xff] %v1137
                %v1139 = vld [vmem:[%s1125 + $0x30] sm:$0xff]
                %1140 = vst [vmem:[%s1126 + $0x30] sm:$0xff] %v1139
                %v1141 = vld [vmem:[%s1125 + $0x38] sm:$0xff]
                %1142 = vst [vmem:[%s1126 + $0x38] sm:$0xff] %v1141
                %v1143 = vld [vmem:[%s1125 + $0x40] sm:$0xff]
                %1144 = vst [vmem:[%s1126 + $0x40] sm:$0xff] %v1143
                %v1145 = vld [vmem:[%s1125 + $0x48] sm:$0xff]
                %1146 = vst [vmem:[%s1126 + $0x48] sm:$0xff] %v1145
                %v1147 = vld [vmem:[%s1125 + $0x50] sm:$0xff]
                %1148 = vst [vmem:[%s1126 + $0x50] sm:$0xff] %v1147
                %v1149 = vld [vmem:[%s1125 + $0x58] sm:$0xff]
                %1150 = vst [vmem:[%s1126 + $0x58] sm:$0xff] %v1149
                %v1151 = vld [vmem:[%s1125 + $0x60] sm:$0xff]
                %1152 = vst [vmem:[%s1126 + $0x60] sm:$0xff] %v1151
                %v1153 = vld [vmem:[%s1125 + $0x68] sm:$0xff]
                %1154 = vst [vmem:[%s1126 + $0x68] sm:$0xff] %v1153
                %v1155 = vld [vmem:[%s1125 + $0x70] sm:$0xff]
                %1156 = vst [vmem:[%s1126 + $0x70] sm:$0xff] %v1155
                %v1157 = vld [vmem:[%s1125 + $0x78] sm:$0xff]
                %1158 = vst [vmem:[%s1126 + $0x78] sm:$0xff] %v1157
                %s1159 = sadd.s32 1, %s1124
                %p1160 = scmp.ge.s32.totalorder %s1159, %s1117
                %s1161 = scalar_select %p1160, 0, %s1159
                %s1162 = smul.u32 %s1161, 128
                %s1163 = smul.u32 %s1161, 128
                %s1164 = scalar_lea.vmem %s921, %s1162 [#allocation3]
                %s1165 = scalar_lea.vmem %s1108, %s1163
              $region117: #{tpu_custom_call.1} parent=111 // loop_footer
                %s1121 = sadd.s32 %s1119, 1
              $region118: #{tpu_custom_call.1} parent=111 // loop_footer_branch
                %1118 = sbr.rel target = $region114
              $region119: #{tpu_custom_call.1} parent=111 // loop_exit
                _
              %s1166 = sshrl.u32 %s1104, 4
              %s1167 = sand.u32 %s1104, 15
              %s1168 = smul.u32 %s1166, 16
              %s1169 = smul.u32 8, %s1168
              %s1170 = scalar_lea.vmem %s921, %s1169 [#allocation3]
              %s1171 = smul.u32 8, %s1168
              %s1172 = scalar_lea.vmem %s1108, %s1171
              // While loop
              $region120: #{tpu_custom_call.1} parent=111 // loop_pre_header
                _
              $region121: #{tpu_custom_call.1} parent=111 // loop_header
                %s1174 = sphi 0, %s1176
                %p1175 = scmp.ge.s32.totalorder %s1174, %s1167
                %s1179 = sphi 0, %s1186
                %s1180 = sphi %s1170, %s1189
                %s1181 = sphi %s1172, %s1190
              $region122: #{tpu_custom_call.1} parent=111 // loop_header_branch
                %1178 = sbr.rel (%p1175) target = $region126
              $region123: #{tpu_custom_call.1} parent=111 // loop_body
                %v1182 = vld [vmem:[%s1180] sm:$0xff]
                %1183 = vst [vmem:[%s1181] sm:$0xff] %v1182
                %s1184 = sadd.s32 1, %s1179
                %p1185 = scmp.ge.s32.totalorder %s1184, %s1167
                %s1186 = scalar_select %p1185, 0, %s1184
                %s1187 = smul.u32 %s1186, 8
                %s1188 = smul.u32 %s1186, 8
                %s1189 = scalar_lea.vmem %s1170, %s1187 [#allocation3]
                %s1190 = scalar_lea.vmem %s1172, %s1188
              $region124: #{tpu_custom_call.1} parent=111 // loop_footer
                %s1176 = sadd.s32 %s1174, 1
              $region125: #{tpu_custom_call.1} parent=111 // loop_footer_branch
                %1173 = sbr.rel target = $region121
              $region126: #{tpu_custom_call.1} parent=111 // loop_exit
                _
            $region112: #{tpu_custom_call.1} parent=103 // pred_fallthru
              _
          $region104: #{tpu_custom_call.1} parent=99 // pred_fallthru
            _
          %1269 = vnop
        $region100: #{tpu_custom_call.1} parent=43 // pred_fallthru
          _
        // Predicated region
        $region149: #{tpu_custom_call.1} parent=43 // pred_check
          %p1270 = pneg %p226
        $region150: #{tpu_custom_call.1} parent=43 // pred_check_branch
          %1272 = sbr.rel (%p1270) target = $region152
        $region151: #{tpu_custom_call.1} parent=43 // pred_region
          %s1273 = smul.u32 16, %s20
          %s1274 = ssub.s32 63, %s1273
          %p1275 = scmp.lt.s32.totalorder %s1274, 16
          %s1276 = scalar_select %p1275, %s1274, 16
          %s1277 = smul.u32 128, %s1276
          %p1278 = scmp.ne.s32.totalorder 0, %s1277
          %s1279 = smul.addr %s1273, 8
          %s1280 = scalar_lea.vmem %s8, %s1279
          // Predicated region
          $region153: #{tpu_custom_call.1} parent=151 // pred_check
            %p1281 = pneg %p1278
          $region154: #{tpu_custom_call.1} parent=151 // pred_check_branch
            %1283 = sbr.rel (%p1281) target = $region156
          $region155: #{tpu_custom_call.1} parent=151 // pred_region
            // Predicated region
            $region157: #{tpu_custom_call.1} parent=155 // pred_check
              _
            $region158: #{tpu_custom_call.1} parent=155 // pred_check_branch
              %1285 = sbr.rel (0) target = $region160
            $region159: #{tpu_custom_call.1} parent=155 // pred_region
              // Predicated region
              $region179: #{tpu_custom_call.1} parent=159 // pred_check
                _
              $region180: #{tpu_custom_call.1} parent=159 // pred_check_branch
                %1364 = sbr.rel (0) target = $region182
              $region181: #{tpu_custom_call.1} parent=159 // pred_region
                %s1365 = sshrl.u32 %s1276, 4
                // While loop
                $region183: #{tpu_custom_call.1} parent=181 // loop_pre_header
                  _
                $region184: #{tpu_custom_call.1} parent=181 // loop_header
                  %s1367 = sphi 0, %s1369
                  %p1368 = scmp.ge.s32.totalorder %s1367, %s1365
                  %s1372 = sphi 0, %s1409
                  %s1373 = sphi %s925, %s1412
                  %s1374 = sphi %s1280, %s1413
                $region185: #{tpu_custom_call.1} parent=181 // loop_header_branch
                  %1371 = sbr.rel (%p1368) target = $region189
                $region186: #{tpu_custom_call.1} parent=181 // loop_body
                  %v1375 = vld [vmem:[%s1373] sm:$0xff]
                  %1376 = vst [vmem:[%s1374] sm:$0xff] %v1375
                  %v1377 = vld [vmem:[%s1373 + $0x8] sm:$0xff]
                  %1378 = vst [vmem:[%s1374 + $0x8] sm:$0xff] %v1377
                  %v1379 = vld [vmem:[%s1373 + $0x10] sm:$0xff]
                  %1380 = vst [vmem:[%s1374 + $0x10] sm:$0xff] %v1379
                  %v1381 = vld [vmem:[%s1373 + $0x18] sm:$0xff]
                  %1382 = vst [vmem:[%s1374 + $0x18] sm:$0xff] %v1381
                  %v1383 = vld [vmem:[%s1373 + $0x20] sm:$0xff]
                  %1384 = vst [vmem:[%s1374 + $0x20] sm:$0xff] %v1383
                  %v1385 = vld [vmem:[%s1373 + $0x28] sm:$0xff]
                  %1386 = vst [vmem:[%s1374 + $0x28] sm:$0xff] %v1385
                  %v1387 = vld [vmem:[%s1373 + $0x30] sm:$0xff]
                  %1388 = vst [vmem:[%s1374 + $0x30] sm:$0xff] %v1387
                  %v1389 = vld [vmem:[%s1373 + $0x38] sm:$0xff]
                  %1390 = vst [vmem:[%s1374 + $0x38] sm:$0xff] %v1389
                  %v1391 = vld [vmem:[%s1373 + $0x40] sm:$0xff]
                  %1392 = vst [vmem:[%s1374 + $0x40] sm:$0xff] %v1391
                  %v1393 = vld [vmem:[%s1373 + $0x48] sm:$0xff]
                  %1394 = vst [vmem:[%s1374 + $0x48] sm:$0xff] %v1393
                  %v1395 = vld [vmem:[%s1373 + $0x50] sm:$0xff]
                  %1396 = vst [vmem:[%s1374 + $0x50] sm:$0xff] %v1395
                  %v1397 = vld [vmem:[%s1373 + $0x58] sm:$0xff]
                  %1398 = vst [vmem:[%s1374 + $0x58] sm:$0xff] %v1397
                  %v1399 = vld [vmem:[%s1373 + $0x60] sm:$0xff]
                  %1400 = vst [vmem:[%s1374 + $0x60] sm:$0xff] %v1399
                  %v1401 = vld [vmem:[%s1373 + $0x68] sm:$0xff]
                  %1402 = vst [vmem:[%s1374 + $0x68] sm:$0xff] %v1401
                  %v1403 = vld [vmem:[%s1373 + $0x70] sm:$0xff]
                  %1404 = vst [vmem:[%s1374 + $0x70] sm:$0xff] %v1403
                  %v1405 = vld [vmem:[%s1373 + $0x78] sm:$0xff]
                  %1406 = vst [vmem:[%s1374 + $0x78] sm:$0xff] %v1405
                  %s1407 = sadd.s32 1, %s1372
                  %p1408 = scmp.ge.s32.totalorder %s1407, %s1365
                  %s1409 = scalar_select %p1408, 0, %s1407
                  %s1410 = smul.u32 %s1409, 128
                  %s1411 = smul.u32 %s1409, 128
                  %s1412 = scalar_lea.vmem %s925, %s1410 [#allocation4]
                  %s1413 = scalar_lea.vmem %s1280, %s1411
                $region187: #{tpu_custom_call.1} parent=181 // loop_footer
                  %s1369 = sadd.s32 %s1367, 1
                $region188: #{tpu_custom_call.1} parent=181 // loop_footer_branch
                  %1366 = sbr.rel target = $region184
                $region189: #{tpu_custom_call.1} parent=181 // loop_exit
                  _
                %s1414 = sshrl.u32 %s1276, 4
                %s1415 = sand.u32 %s1276, 15
                %s1416 = smul.u32 %s1414, 16
                %s1417 = smul.u32 8, %s1416
                %s1418 = scalar_lea.vmem %s925, %s1417 [#allocation4]
                %s1419 = smul.u32 8, %s1416
                %s1420 = scalar_lea.vmem %s1280, %s1419
                // While loop
                $region190: #{tpu_custom_call.1} parent=181 // loop_pre_header
                  _
                $region191: #{tpu_custom_call.1} parent=181 // loop_header
                  %s1422 = sphi 0, %s1424
                  %p1423 = scmp.ge.s32.totalorder %s1422, %s1415
                  %s1427 = sphi 0, %s1434
                  %s1428 = sphi %s1418, %s1437
                  %s1429 = sphi %s1420, %s1438
                $region192: #{tpu_custom_call.1} parent=181 // loop_header_branch
                  %1426 = sbr.rel (%p1423) target = $region196
                $region193: #{tpu_custom_call.1} parent=181 // loop_body
                  %v1430 = vld [vmem:[%s1428] sm:$0xff]
                  %1431 = vst [vmem:[%s1429] sm:$0xff] %v1430
                  %s1432 = sadd.s32 1, %s1427
                  %p1433 = scmp.ge.s32.totalorder %s1432, %s1415
                  %s1434 = scalar_select %p1433, 0, %s1432
                  %s1435 = smul.u32 %s1434, 8
                  %s1436 = smul.u32 %s1434, 8
                  %s1437 = scalar_lea.vmem %s1418, %s1435 [#allocation4]
                  %s1438 = scalar_lea.vmem %s1420, %s1436
                $region194: #{tpu_custom_call.1} parent=181 // loop_footer
                  %s1424 = sadd.s32 %s1422, 1
                $region195: #{tpu_custom_call.1} parent=181 // loop_footer_branch
                  %1421 = sbr.rel target = $region191
                $region196: #{tpu_custom_call.1} parent=181 // loop_exit
                  _
              $region182: #{tpu_custom_call.1} parent=159 // pred_fallthru
                _
              // Predicated region
              $region197: #{tpu_custom_call.1} parent=159 // pred_check
                _
              $region198: #{tpu_custom_call.1} parent=159 // pred_check_branch
                %1440 = sbr.rel target = $region200
              $region199: #{tpu_custom_call.1} parent=159 // pred_region
                _
              $region200: #{tpu_custom_call.1} parent=159 // pred_fallthru
                _
            $region160: #{tpu_custom_call.1} parent=155 // pred_fallthru
              _
            // Predicated region
            $region161: #{tpu_custom_call.1} parent=155 // pred_check
              _
            $region162: #{tpu_custom_call.1} parent=155 // pred_check_branch
              %1287 = sbr.rel target = $region164
            $region163: #{tpu_custom_call.1} parent=155 // pred_region
              %s1289 = sshrl.u32 %s1276, 4
              // While loop
              $region165: #{tpu_custom_call.1} parent=163 // loop_pre_header
                _
              $region166: #{tpu_custom_call.1} parent=163 // loop_header
                %s1291 = sphi 0, %s1293
                %p1292 = scmp.ge.s32.totalorder %s1291, %s1289
                %s1296 = sphi 0, %s1333
                %s1297 = sphi %s925, %s1336
                %s1298 = sphi %s1280, %s1337
              $region167: #{tpu_custom_call.1} parent=163 // loop_header_branch
                %1295 = sbr.rel (%p1292) target = $region171
              $region168: #{tpu_custom_call.1} parent=163 // loop_body
                %v1299 = vld [vmem:[%s1297] sm:$0xff]
                %1300 = vst [vmem:[%s1298] sm:$0xff] %v1299
                %v1301 = vld [vmem:[%s1297 + $0x8] sm:$0xff]
                %1302 = vst [vmem:[%s1298 + $0x8] sm:$0xff] %v1301
                %v1303 = vld [vmem:[%s1297 + $0x10] sm:$0xff]
                %1304 = vst [vmem:[%s1298 + $0x10] sm:$0xff] %v1303
                %v1305 = vld [vmem:[%s1297 + $0x18] sm:$0xff]
                %1306 = vst [vmem:[%s1298 + $0x18] sm:$0xff] %v1305
                %v1307 = vld [vmem:[%s1297 + $0x20] sm:$0xff]
                %1308 = vst [vmem:[%s1298 + $0x20] sm:$0xff] %v1307
                %v1309 = vld [vmem:[%s1297 + $0x28] sm:$0xff]
                %1310 = vst [vmem:[%s1298 + $0x28] sm:$0xff] %v1309
                %v1311 = vld [vmem:[%s1297 + $0x30] sm:$0xff]
                %1312 = vst [vmem:[%s1298 + $0x30] sm:$0xff] %v1311
                %v1313 = vld [vmem:[%s1297 + $0x38] sm:$0xff]
                %1314 = vst [vmem:[%s1298 + $0x38] sm:$0xff] %v1313
                %v1315 = vld [vmem:[%s1297 + $0x40] sm:$0xff]
                %1316 = vst [vmem:[%s1298 + $0x40] sm:$0xff] %v1315
                %v1317 = vld [vmem:[%s1297 + $0x48] sm:$0xff]
                %1318 = vst [vmem:[%s1298 + $0x48] sm:$0xff] %v1317
                %v1319 = vld [vmem:[%s1297 + $0x50] sm:$0xff]
                %1320 = vst [vmem:[%s1298 + $0x50] sm:$0xff] %v1319
                %v1321 = vld [vmem:[%s1297 + $0x58] sm:$0xff]
                %1322 = vst [vmem:[%s1298 + $0x58] sm:$0xff] %v1321
                %v1323 = vld [vmem:[%s1297 + $0x60] sm:$0xff]
                %1324 = vst [vmem:[%s1298 + $0x60] sm:$0xff] %v1323
                %v1325 = vld [vmem:[%s1297 + $0x68] sm:$0xff]
                %1326 = vst [vmem:[%s1298 + $0x68] sm:$0xff] %v1325
                %v1327 = vld [vmem:[%s1297 + $0x70] sm:$0xff]
                %1328 = vst [vmem:[%s1298 + $0x70] sm:$0xff] %v1327
                %v1329 = vld [vmem:[%s1297 + $0x78] sm:$0xff]
                %1330 = vst [vmem:[%s1298 + $0x78] sm:$0xff] %v1329
                %s1331 = sadd.s32 1, %s1296
                %p1332 = scmp.ge.s32.totalorder %s1331, %s1289
                %s1333 = scalar_select %p1332, 0, %s1331
                %s1334 = smul.u32 %s1333, 128
                %s1335 = smul.u32 %s1333, 128
                %s1336 = scalar_lea.vmem %s925, %s1334 [#allocation4]
                %s1337 = scalar_lea.vmem %s1280, %s1335
              $region169: #{tpu_custom_call.1} parent=163 // loop_footer
                %s1293 = sadd.s32 %s1291, 1
              $region170: #{tpu_custom_call.1} parent=163 // loop_footer_branch
                %1290 = sbr.rel target = $region166
              $region171: #{tpu_custom_call.1} parent=163 // loop_exit
                _
              %s1338 = sshrl.u32 %s1276, 4
              %s1339 = sand.u32 %s1276, 15
              %s1340 = smul.u32 %s1338, 16
              %s1341 = smul.u32 8, %s1340
              %s1342 = scalar_lea.vmem %s925, %s1341 [#allocation4]
              %s1343 = smul.u32 8, %s1340
              %s1344 = scalar_lea.vmem %s1280, %s1343
              // While loop
              $region172: #{tpu_custom_call.1} parent=163 // loop_pre_header
                _
              $region173: #{tpu_custom_call.1} parent=163 // loop_header
                %s1346 = sphi 0, %s1348
                %p1347 = scmp.ge.s32.totalorder %s1346, %s1339
                %s1351 = sphi 0, %s1358
                %s1352 = sphi %s1342, %s1361
                %s1353 = sphi %s1344, %s1362
              $region174: #{tpu_custom_call.1} parent=163 // loop_header_branch
                %1350 = sbr.rel (%p1347) target = $region178
              $region175: #{tpu_custom_call.1} parent=163 // loop_body
                %v1354 = vld [vmem:[%s1352] sm:$0xff]
                %1355 = vst [vmem:[%s1353] sm:$0xff] %v1354
                %s1356 = sadd.s32 1, %s1351
                %p1357 = scmp.ge.s32.totalorder %s1356, %s1339
                %s1358 = scalar_select %p1357, 0, %s1356
                %s1359 = smul.u32 %s1358, 8
                %s1360 = smul.u32 %s1358, 8
                %s1361 = scalar_lea.vmem %s1342, %s1359 [#allocation4]
                %s1362 = scalar_lea.vmem %s1344, %s1360
              $region176: #{tpu_custom_call.1} parent=163 // loop_footer
                %s1348 = sadd.s32 %s1346, 1
              $region177: #{tpu_custom_call.1} parent=163 // loop_footer_branch
                %1345 = sbr.rel target = $region173
              $region178: #{tpu_custom_call.1} parent=163 // loop_exit
                _
            $region164: #{tpu_custom_call.1} parent=155 // pred_fallthru
              _
          $region156: #{tpu_custom_call.1} parent=151 // pred_fallthru
            _
          %1441 = vnop
        $region152: #{tpu_custom_call.1} parent=43 // pred_fallthru
          _
      $region44: #{tpu_custom_call.1} parent=5 // pred_fallthru
        _
      %p1442 = scmp.le.s32.totalorder 2, %s15
      // Predicated region
      $region201: #{tpu_custom_call.1} parent=5 // pred_check
        %p1443 = pneg %p1442
      $region202: #{tpu_custom_call.1} parent=5 // pred_check_branch
        %1445 = sbr.rel (%p1443) target = $region204
      $region203: #{tpu_custom_call.1} parent=5 // pred_region
        %s1446 = ssub.s32 %s15, 2
        // Predicated region
        $region205: #{tpu_custom_call.1} parent=203 // pred_check
          %p1447 = pneg %p180
        $region206: #{tpu_custom_call.1} parent=203 // pred_check_branch
          %1449 = sbr.rel (%p1447) target = $region208
        $region207: #{tpu_custom_call.1} parent=203 // pred_region
          %s1450 = sand.u32 %s165, 1
          %s1451 = sand.u32 %s165, 1
          %s1452 = smul.addr %s1451, 128
          %s1453 = scalar_lea.vmem [#allocation2], %s1452
        $region208: #{tpu_custom_call.1} parent=203 // pred_fallthru
          _
        // Predicated region
        $region209: #{tpu_custom_call.1} parent=203 // pred_check
          %p1454 = pneg %p206
        $region210: #{tpu_custom_call.1} parent=203 // pred_check_branch
          %1456 = sbr.rel (%p1454) target = $region212
        $region211: #{tpu_custom_call.1} parent=203 // pred_region
          %s1457 = sand.u32 %s191, 1
          %s1458 = sand.u32 %s191, 1
          %s1459 = smul.addr %s1458, 128
          %s1460 = scalar_lea.vmem [#allocation3], %s1459
        $region212: #{tpu_custom_call.1} parent=203 // pred_fallthru
          _
        // Predicated region
        $region213: #{tpu_custom_call.1} parent=203 // pred_check
          %p1461 = pneg %p232
        $region214: #{tpu_custom_call.1} parent=203 // pred_check_branch
          %1463 = sbr.rel (%p1461) target = $region216
        $region215: #{tpu_custom_call.1} parent=203 // pred_region
          %s1464 = sand.u32 %s217, 1
          %s1465 = sand.u32 %s217, 1
          %s1466 = smul.addr %s1465, 128
          %s1467 = scalar_lea.vmem [#allocation4], %s1466
        $region216: #{tpu_custom_call.1} parent=203 // pred_fallthru
          _
      $region204: #{tpu_custom_call.1} parent=5 // pred_fallthru
        _
    $region6: #{tpu_custom_call.1} parent=1 // loop_footer
      %s19 = sadd.s32 1, %s15
    $region7: #{tpu_custom_call.1} parent=1 // loop_footer_branch
      %14 = sbr.rel target = $region3
    $region8: #{tpu_custom_call.1} parent=1 // loop_exit
      _

</llo_original>
